<compile_context>
chip_gen: v5e
topology: v5e:2x2
jax: 0.10.0
libtpu: 0.0.40
codegen_flags: <defaults>
</compile_context>

<pallas_src>
import math
import functools

import jax
import jax.numpy as jnp
from jax.experimental import pallas as pl
from jax.experimental.pallas import tpu as pltpu


def _opra_kernel(x_ref, vec_ref, wqkv_ref, wo_ref, mask_ref, o_ref, *, O, D, eps, tok):
    bs = x_ref.shape[0]
    R = bs * O
    n_groups = R // tok

    vec = vec_ref[...]                                 # (8, D) f32 param table
    gamma, beta = vec[0:1, :], vec[1:2, :]
    bq, bv, bo = vec[2:3, :], vec[3:4, :], vec[4:5, :]

    # ---- LayerNorm over D (f32) on the flattened (R, D) token view ----
    x = x_ref[...].astype(jnp.float32).reshape(R, D)
    mean = jnp.mean(x, axis=-1, keepdims=True)
    var = jnp.mean(jnp.square(x - mean), axis=-1, keepdims=True)
    xn = (x - mean) * jax.lax.rsqrt(var + eps)
    xn = xn * gamma + beta                             # (1, D) broadcasts over (R, D)
    xn16 = xn.astype(jnp.bfloat16)                     # bf16 into MXU, f32 accumulate

    # ---- fused QKV projection: single (R, D) @ (D, 3D) MXU matmul ----
    qkv = jnp.dot(xn16, wqkv_ref[...], preferred_element_type=jnp.float32)
    q = qkv[:, 0:D] + bq                               # softmax scale pre-folded into Wq/bq
    k = qkv[:, D:2 * D]                                # key bias dropped: cancels in softmax
    v = qkv[:, 2 * D:3 * D] + bv

    # ---- block-diagonal packed attention (G sequences -> one (tok, tok) score blk) ----
    q3 = q.reshape(n_groups, tok, D).astype(jnp.bfloat16)
    k3 = k.reshape(n_groups, tok, D).astype(jnp.bfloat16)
    v3 = v.reshape(n_groups, tok, D).astype(jnp.bfloat16)
    s = jnp.einsum('gqd,gkd->gqk', q3, k3, preferred_element_type=jnp.float32)
    s = s + mask_ref[...]                              # additive block-diag mask, pre-rowmax
    s = s - jnp.max(s, axis=-1, keepdims=True)
    p = jnp.exp(s)
    p = p * pl.reciprocal(jnp.sum(p, axis=-1, keepdims=True), approx=True)   # EUP slot
    # TODO(synk): attention dropout / output dropout omitted (eval-mode identity).
    attn = jnp.einsum('gqk,gkd->gqd', p.astype(jnp.bfloat16), v3,
                      preferred_element_type=jnp.float32)

    # ---- output projection on the flattened (R, D) view ----
    out = jnp.dot(attn.reshape(R, D).astype(jnp.bfloat16), wo_ref[...],
                  preferred_element_type=jnp.float32) + bo
    o_ref[...] = out.reshape(bs, O, D).astype(o_ref.dtype)


def object_pose_relation_attention(x, params, *, block_cap=256, tok_target=256):
    """x: [B, T, N_patches, O, D] -> same shape."""
    B, T, N, O, D = x.shape
    S = B * T * N
    scale = 1.0 / math.sqrt(D)

    # Packed-attention group: G sequences -> tok = G*O tokens per (tok, tok) score block.
    # 256 matches v6e/v7x's 256-wide MXU; v5e (128-wide MXU) can use tok_target=128.
    G = max(1, tok_target // O)
    tok = G * O
    unit = (8 * G) // math.gcd(8, G)                   # lcm(8, G): sublane + group alignment

    # block_s (sequences per grid step): multiple of `unit`, <= block_cap, even grid
    # so v7x's two TensorCores split the "parallel" axis evenly.
    s_units = pl.cdiv(S, unit)
    cap_units = max(1, block_cap // unit)
    if s_units <= 1:
        n_grid = 1
    else:
        n_grid = max(2, 2 * pl.cdiv(pl.cdiv(s_units, cap_units), 2))
    block_s = pl.cdiv(s_units, n_grid) * unit
    s_pad = n_grid * block_s

    xf = x.reshape(S, O, D)
    if s_pad != S:                                     # pad whole sequences (sliced off below);
        xf = jnp.pad(xf, ((0, s_pad - S), (0, 0), (0, 0)))   # mask isolates them from real rows

    f32, bf16 = jnp.float32, jnp.bfloat16
    w = params["in_proj_weight"].astype(f32)           # (3D, D), PyTorch layout
    b = params["in_proj_bias"].astype(f32)             # (3D,)
    # Fused QKV weight, pre-transposed (kernel does xn @ W), scale folded into Q columns.
    wqkv = jnp.concatenate([w[0:D].T * scale, w[D:2 * D].T, w[2 * D:3 * D].T],
                           axis=1).astype(bf16)        # (D, 3D)
    wo = params["out_proj_weight"].T.astype(bf16)      # (D, D)
    # Consolidated (8, D) vector-param table: [gamma, beta, bq*scale, bv, bo, 0, 0, 0].
    vecs = jnp.zeros((8, D), f32)
    vecs = vecs.at[0].set(params["ln_gamma"].astype(f32))
    vecs = vecs.at[1].set(params["ln_beta"].astype(f32))
    vecs = vecs.at[2].set(b[0:D] * scale)              # bq (scaled); bk dropped (exact)
    vecs = vecs.at[3].set(b[2 * D:3 * D])              # bv
    vecs = vecs.at[4].set(params["out_proj_bias"].astype(f32))
    # Block-diagonal additive mask: same-sequence tokens attend, cross-sequence -> -1e30.
    seq_id = jnp.arange(tok, dtype=jnp.int32) // O
    mask = jnp.where(seq_id[:, None] == seq_id[None, :], 0.0, -1e30).astype(f32)

    kern = functools.partial(_opra_kernel, O=O, D=D, eps=1e-5, tok=tok)
    const = lambda i: (0, 0)

    out = pl.pallas_call(
        kern,
        out_shape=jax.ShapeDtypeStruct((s_pad, O, D), x.dtype),
        grid_spec=pltpu.PrefetchScalarGridSpec(
            num_scalar_prefetch=0,
            grid=(n_grid,),
            in_specs=[
                pl.BlockSpec((block_s, O, D), lambda i: (i, 0, 0)),  # x tile
                pl.BlockSpec((8, D), const),                         # vector-param table
                pl.BlockSpec((D, 3 * D), const),                     # fused Wqkv^T (bf16)
                pl.BlockSpec((D, D), const),                         # Wo^T (bf16)
                pl.BlockSpec((tok, tok), const),                     # block-diag mask
            ],
            out_specs=pl.BlockSpec((block_s, O, D), lambda i: (i, 0, 0)),
        ),
        compiler_params=pltpu.CompilerParams(
            dimension_semantics=("parallel",),
            vmem_limit_bytes=40 * 1024 * 1024,          # headroom; safe under v7x's 64 MiB
        ),
    )(xf, vecs, wqkv, wo, mask)

    if s_pad != S:
        out = out[:S]
    return out.reshape(B, T, N, O, D)


def reference(x, params):
    """Pure-JAX f32 reference of the PyTorch forward (eval mode)."""
    B, T, N, O, D = x.shape
    xf = x.reshape(-1, O, D).astype(jnp.float32)
    mean = xf.mean(-1, keepdims=True)
    var = ((xf - mean) ** 2).mean(-1, keepdims=True)
    xn = (xf - mean) / jnp.sqrt(var + 1e-5)
    xn = xn * params["ln_gamma"] + params["ln_beta"]
    w, b = params["in_proj_weight"], params["in_proj_bias"]
    q = xn @ w[:D].T + b[:D]
    k = xn @ w[D:2 * D].T + b[D:2 * D]
    v = xn @ w[2 * D:].T + b[2 * D:]
    s = (q @ jnp.swapaxes(k, -1, -2)) / jnp.sqrt(D)
    p = jax.nn.softmax(s, axis=-1)
    a = p @ v
    out = a @ params["out_proj_weight"].T + params["out_proj_bias"]
    return out.reshape(B, T, N, O, D).astype(x.dtype)


def init_params(key, D):
    """Deterministic synthetic parameters (nn.MultiheadAttention / LayerNorm shapes)."""
    k1, k2, k3, k4, k5 = jax.random.split(key, 5)
    bound_in = math.sqrt(6.0 / (D + D))
    return {
        "ln_gamma": jnp.ones((D,), jnp.float32),
        "ln_beta": 0.05 * jax.random.normal(k5, (D,), jnp.float32),
        "in_proj_weight": jax.random.uniform(k1, (3 * D, D), jnp.float32,
                                             -bound_in, bound_in),
        "in_proj_bias": jax.random.uniform(k3, (3 * D,), jnp.float32, -0.1, 0.1),
        "out_proj_weight": jax.random.uniform(k2, (D, D), jnp.float32,
                                              -1.0 / math.sqrt(D), 1.0 / math.sqrt(D)),
        "out_proj_bias": jax.random.uniform(k4, (D,), jnp.float32, -0.1, 0.1),
    }


if __name__ == "__main__":
    key = jax.random.PRNGKey(0)
    kx, kp = jax.random.split(key)

    B, T, N_patches, O, D = 2, 8, 4, 8, 32
    x = jax.random.normal(kx, (B, T, N_patches, O, D), jnp.float32)
    params = init_params(kp, D)

    out = object_pose_relation_attention(x, params)
    out = jax.block_until_ready(out)

    ref = reference(x, params)
    assert out.shape == (B, T, N_patches, O, D)
    # bf16 MXU inputs (f32 accumulation) + approx reciprocal -> bf16-level tolerance.
    assert jnp.allclose(out, ref, atol=5e-2, rtol=5e-2), "mismatch vs reference"

    print("KERNEL_OK")
</pallas_src>

<mosaic_0001>
module attributes {stable_mosaic.version = 11 : i64} {
  func.func @_opra_kernel(%arg0: i32, %arg1: memref<32x8x32xf32, #tpu.memory_space<vmem>>, %arg2: memref<8x32xf32, #tpu.memory_space<vmem>>, %arg3: memref<32x96xbf16, #tpu.memory_space<vmem>>, %arg4: memref<32x32xbf16, #tpu.memory_space<vmem>>, %arg5: memref<256x256xf32, #tpu.memory_space<vmem>>, %arg6: memref<32x8x32xf32, #tpu.memory_space<vmem>>) attributes {dimension_semantics = [#tpu.dimension_semantics<parallel>], iteration_bounds = array<i64: 2>, scalar_prefetch = 0 : i64, scratch_operands = 0 : i64, tpu.core_type = #tpu.core_type<tc>, window_params = [{transform_indices = @transform_0, window_bounds = array<i64: 32, 8, 32>}, {pipeline_mode = #tpu.pipeline_mode<synchronous>, transform_indices = @transform_1, window_bounds = array<i64: 8, 32>}, {pipeline_mode = #tpu.pipeline_mode<synchronous>, transform_indices = @transform_2, window_bounds = array<i64: 32, 96>}, {pipeline_mode = #tpu.pipeline_mode<synchronous>, transform_indices = @transform_3, window_bounds = array<i64: 32, 32>}, {pipeline_mode = #tpu.pipeline_mode<synchronous>, transform_indices = @transform_4, window_bounds = array<i64: 256, 256>}, {transform_indices = @transform_5, window_bounds = array<i64: 32, 8, 32>}]} {
    %c0 = arith.constant 0 : index
    %c0_0 = arith.constant 0 : index
    %0 = vector.load %arg2[%c0, %c0_0] : memref<8x32xf32, #tpu.memory_space<vmem>>, vector<8x32xf32>
    %1 = vector.extract_strided_slice %0 {offsets = [0, 0], sizes = [1, 32], strides = [1, 1]} : vector<8x32xf32> to vector<1x32xf32>
    %2 = vector.extract_strided_slice %0 {offsets = [1, 0], sizes = [1, 32], strides = [1, 1]} : vector<8x32xf32> to vector<1x32xf32>
    %3 = vector.extract_strided_slice %0 {offsets = [2, 0], sizes = [1, 32], strides = [1, 1]} : vector<8x32xf32> to vector<1x32xf32>
    %4 = vector.extract_strided_slice %0 {offsets = [3, 0], sizes = [1, 32], strides = [1, 1]} : vector<8x32xf32> to vector<1x32xf32>
    %5 = vector.extract_strided_slice %0 {offsets = [4, 0], sizes = [1, 32], strides = [1, 1]} : vector<8x32xf32> to vector<1x32xf32>
    %c0_1 = arith.constant 0 : index
    %c0_2 = arith.constant 0 : index
    %c0_3 = arith.constant 0 : index
    %6 = vector.load %arg1[%c0_1, %c0_2, %c0_3] : memref<32x8x32xf32, #tpu.memory_space<vmem>>, vector<32x8x32xf32>
    %7 = vector.shape_cast %6 : vector<32x8x32xf32> to vector<256x32xf32>
    %cst = arith.constant dense<0.000000e+00> : vector<256xf32>
    %8 = vector.multi_reduction <add>, %7, %cst [1] : vector<256x32xf32> to vector<256xf32>
    %9 = vector.shape_cast %8 : vector<256xf32> to vector<256x1xf32>
    %cst_4 = arith.constant 3.200000e+01 : f32
    %10 = vector.broadcast %cst_4 : f32 to vector<256x1xf32>
    %11 = arith.divf %9, %10 : vector<256x1xf32>
    %12 = vector.broadcast %11 : vector<256x1xf32> to vector<256x32xf32>
    %13 = arith.subf %7, %12 : vector<256x32xf32>
    %14 = arith.mulf %13, %13 : vector<256x32xf32>
    %cst_5 = arith.constant dense<0.000000e+00> : vector<256xf32>
    %15 = vector.multi_reduction <add>, %14, %cst_5 [1] : vector<256x32xf32> to vector<256xf32>
    %16 = vector.shape_cast %15 : vector<256xf32> to vector<256x1xf32>
    %cst_6 = arith.constant 3.200000e+01 : f32
    %17 = vector.broadcast %cst_6 : f32 to vector<256x1xf32>
    %18 = arith.divf %16, %17 : vector<256x1xf32>
    %19 = vector.broadcast %11 : vector<256x1xf32> to vector<256x32xf32>
    %20 = arith.subf %7, %19 : vector<256x32xf32>
    %cst_7 = arith.constant 9.99999974E-6 : f32
    %21 = vector.broadcast %cst_7 : f32 to vector<256x1xf32>
    %22 = arith.addf %18, %21 : vector<256x1xf32>
    %23 = math.rsqrt %22 : vector<256x1xf32>
    %24 = vector.broadcast %23 : vector<256x1xf32> to vector<256x32xf32>
    %25 = arith.mulf %20, %24 : vector<256x32xf32>
    %26 = vector.broadcast %1 : vector<1x32xf32> to vector<256x32xf32>
    %27 = arith.mulf %25, %26 : vector<256x32xf32>
    %28 = vector.broadcast %2 : vector<1x32xf32> to vector<256x32xf32>
    %29 = arith.addf %27, %28 : vector<256x32xf32>
    %30 = arith.truncf %29 : vector<256x32xf32> to vector<256x32xbf16>
    %c0_8 = arith.constant 0 : index
    %c0_9 = arith.constant 0 : index
    %31 = vector.load %arg3[%c0_8, %c0_9] : memref<32x96xbf16, #tpu.memory_space<vmem>>, vector<32x96xbf16>
    %cst_10 = arith.constant dense<0.000000e+00> : vector<256x96xf32>
    %32 = tpu.matmul %30, %31, %cst_10 {dimension_numbers = #tpu.dot_dimension_numbers<[1], [0], [0], [1], [0, 0, 1, 1], [], []>} : vector<256x32xbf16>, vector<32x96xbf16>, vector<256x96xf32> -> vector<256x96xf32>
    %33 = vector.extract_strided_slice %32 {offsets = [0, 0], sizes = [256, 32], strides = [1, 1]} : vector<256x96xf32> to vector<256x32xf32>
    %34 = vector.broadcast %3 : vector<1x32xf32> to vector<256x32xf32>
    %35 = arith.addf %33, %34 : vector<256x32xf32>
    %36 = vector.extract_strided_slice %32 {offsets = [0, 32], sizes = [256, 32], strides = [1, 1]} : vector<256x96xf32> to vector<256x32xf32>
    %37 = vector.extract_strided_slice %32 {offsets = [0, 64], sizes = [256, 32], strides = [1, 1]} : vector<256x96xf32> to vector<256x32xf32>
    %38 = vector.broadcast %4 : vector<1x32xf32> to vector<256x32xf32>
    %39 = arith.addf %37, %38 : vector<256x32xf32>
    %40 = vector.shape_cast %35 : vector<256x32xf32> to vector<1x256x32xf32>
    %41 = arith.truncf %40 : vector<1x256x32xf32> to vector<1x256x32xbf16>
    %42 = vector.shape_cast %36 : vector<256x32xf32> to vector<1x256x32xf32>
    %43 = arith.truncf %42 : vector<1x256x32xf32> to vector<1x256x32xbf16>
    %44 = vector.shape_cast %39 : vector<256x32xf32> to vector<1x256x32xf32>
    %45 = arith.truncf %44 : vector<1x256x32xf32> to vector<1x256x32xbf16>
    "tpu.trace_start"() <{level = 10 : i32, message = "gqd,gkd->gqk"}> : () -> ()
    %cst_11 = arith.constant dense<0.000000e+00> : vector<1x256x256xf32>
    %46 = tpu.matmul %41, %43, %cst_11 {dimension_numbers = #tpu.dot_dimension_numbers<[2], [2], [1], [1], [0, 0, 0, 1, 1, 1], [0], [0]>} : vector<1x256x32xbf16>, vector<1x256x32xbf16>, vector<1x256x256xf32> -> vector<1x256x256xf32>
    "tpu.trace_stop"() : () -> ()
    %c0_12 = arith.constant 0 : index
    %c0_13 = arith.constant 0 : index
    %47 = vector.load %arg5[%c0_12, %c0_13] : memref<256x256xf32, #tpu.memory_space<vmem>>, vector<256x256xf32>
    %48 = vector.shape_cast %47 : vector<256x256xf32> to vector<1x256x256xf32>
    %49 = arith.addf %46, %48 : vector<1x256x256xf32>
    %cst_14 = arith.constant dense<0xFF800000> : vector<1x256xf32>
    %50 = vector.multi_reduction <maximumf>, %49, %cst_14 [2] : vector<1x256x256xf32> to vector<1x256xf32>
    %51 = vector.shape_cast %50 : vector<1x256xf32> to vector<1x256x1xf32>
    %52 = vector.broadcast %51 : vector<1x256x1xf32> to vector<1x256x256xf32>
    %53 = arith.subf %49, %52 : vector<1x256x256xf32>
    %54 = math.exp %53 : vector<1x256x256xf32>
    %cst_15 = arith.constant dense<0.000000e+00> : vector<1x256xf32>
    %55 = vector.multi_reduction <add>, %54, %cst_15 [2] : vector<1x256x256xf32> to vector<1x256xf32>
    %56 = vector.shape_cast %55 : vector<1x256xf32> to vector<1x256x1xf32>
    %57 = tpu.reciprocal %56 {approx = true} : vector<1x256x1xf32> -> vector<1x256x1xf32>
    %58 = vector.broadcast %57 : vector<1x256x1xf32> to vector<1x256x256xf32>
    %59 = arith.mulf %54, %58 : vector<1x256x256xf32>
    %60 = arith.truncf %59 : vector<1x256x256xf32> to vector<1x256x256xbf16>
    "tpu.trace_start"() <{level = 10 : i32, message = "gqk,gkd->gqd"}> : () -> ()
    %cst_16 = arith.constant dense<0.000000e+00> : vector<1x256x32xf32>
    %61 = tpu.matmul %60, %45, %cst_16 {dimension_numbers = #tpu.dot_dimension_numbers<[2], [1], [1], [2], [0, 0, 0, 1, 1, 2], [0], [0]>} : vector<1x256x256xbf16>, vector<1x256x32xbf16>, vector<1x256x32xf32> -> vector<1x256x32xf32>
    "tpu.trace_stop"() : () -> ()
    %62 = vector.shape_cast %61 : vector<1x256x32xf32> to vector<256x32xf32>
    %63 = arith.truncf %62 : vector<256x32xf32> to vector<256x32xbf16>
    %c0_17 = arith.constant 0 : index
    %c0_18 = arith.constant 0 : index
    %64 = vector.load %arg4[%c0_17, %c0_18] : memref<32x32xbf16, #tpu.memory_space<vmem>>, vector<32x32xbf16>
    %cst_19 = arith.constant dense<0.000000e+00> : vector<256x32xf32>
    %65 = tpu.matmul %63, %64, %cst_19 {dimension_numbers = #tpu.dot_dimension_numbers<[1], [0], [0], [1], [0, 0, 1, 1], [], []>} : vector<256x32xbf16>, vector<32x32xbf16>, vector<256x32xf32> -> vector<256x32xf32>
    %66 = vector.broadcast %5 : vector<1x32xf32> to vector<256x32xf32>
    %67 = arith.addf %65, %66 : vector<256x32xf32>
    %68 = vector.shape_cast %67 : vector<256x32xf32> to vector<32x8x32xf32>
    %c0_20 = arith.constant 0 : index
    %c0_21 = arith.constant 0 : index
    %c0_22 = arith.constant 0 : index
    %69 = vector.load %arg6[%c0_20, %c0_21, %c0_22] : memref<32x8x32xf32, #tpu.memory_space<vmem>>, vector<32x8x32xf32>
    tpu.vector_store %arg6[%c0_20, %c0_21, %c0_22], %68 {strides = array<i32>} : memref<32x8x32xf32, #tpu.memory_space<vmem>>, vector<32x8x32xf32>,
    return
  }
  func.func @transform_0(%arg0: i32) -> (i32, i32, i32) {
    %c0_i32 = arith.constant 0 : i32
    %c0_i32_0 = arith.constant 0 : i32
    %c0_i32_1 = arith.constant 0 : i32
    return %arg0, %c0_i32, %c0_i32_0 : i32, i32, i32
  }
  func.func @transform_1(%arg0: i32) -> (i32, i32) {
    %c0_i32 = arith.constant 0 : i32
    %c0_i32_0 = arith.constant 0 : i32
    %c0_i32_1 = arith.constant 0 : i32
    return %c0_i32, %c0_i32_0 : i32, i32
  }
  func.func @transform_2(%arg0: i32) -> (i32, i32) {
    %c0_i32 = arith.constant 0 : i32
    %c0_i32_0 = arith.constant 0 : i32
    %c0_i32_1 = arith.constant 0 : i32
    return %c0_i32, %c0_i32_0 : i32, i32
  }
  func.func @transform_3(%arg0: i32) -> (i32, i32) {
    %c0_i32 = arith.constant 0 : i32
    %c0_i32_0 = arith.constant 0 : i32
    %c0_i32_1 = arith.constant 0 : i32
    return %c0_i32, %c0_i32_0 : i32, i32
  }
  func.func @transform_4(%arg0: i32) -> (i32, i32) {
    %c0_i32 = arith.constant 0 : i32
    %c0_i32_0 = arith.constant 0 : i32
    %c0_i32_1 = arith.constant 0 : i32
    return %c0_i32, %c0_i32_0 : i32, i32
  }
  func.func @transform_5(%arg0: i32) -> (i32, i32, i32) {
    %c0_i32 = arith.constant 0 : i32
    %c0_i32_0 = arith.constant 0 : i32
    %c0_i32_1 = arith.constant 0 : i32
    return %arg0, %c0_i32, %c0_i32_0 : i32, i32, i32
  }
}

</mosaic_0001>

<llo_original>
// kernel: tpu_custom_call.1
$region0: #{tpu_custom_call.1}
  #allocation0 [shape = 'u32[]', space=smem, size = 0x4, offset = 0x4, fixed_abs, tag = 'smem constant byte address 0x4 - core index']
  #allocation1 [shape = 'u32[72,128]{1,0:T(1,128)}', space=vmem, size = 0x9000, scoped, tag = 'internal scratch']
  %s0 = inlined_call_operand.vmem [shape: f32[64,8,32], index: 0, kind: input, shape index: {}]
  %s1 = inlined_call_operand.vmem [shape: f32[8,32], index: 1, kind: input, shape index: {}]
  %s2 = inlined_call_operand.vmem [shape: bf16[32,96], index: 2, kind: input, shape index: {}]
  %s3 = inlined_call_operand.vmem [shape: bf16[32,32], index: 3, kind: input, shape index: {}]
  %s4 = inlined_call_operand.vmem [shape: f32[256,256], index: 4, kind: input, shape index: {}]
  %s5 = inlined_call_operand.vmem [shape: f32[64,8,32], index: 5, kind: output, shape index: {}]
  %s6 = sld [smem:[#allocation0]]
  $region53: #{tpu_custom_call.1} parent=0
    _
  %s8 = ssub.s32 1, %s6
  %s9 = scalar_select 0, %s8, %s6
  loop: start=0, step=1, limit=4
  $region2: #{tpu_custom_call.1} parent=0 // loop_pre_header
    _
  $region3: #{tpu_custom_call.1} parent=0 // loop_header
    %s11 = sphi 0, %s15
    %p12 = scmp.ge.s32.totalorder %s11, 4
    %s21 = sphi 0, %s23
    %s24 = sphi 0, %s21
    %s25 = sphi 0, %s24
    %s41 = sphi 0, %s25
    %s45 = sphi 0, %s45
    %s47 = sphi 0, %s45
    %s48 = sphi 0, %s47
    %s62 = sphi 0, %s48
    %s66 = sphi 0, %s66
    %s68 = sphi 0, %s66
    %s69 = sphi 0, %s68
    %s83 = sphi 0, %s69
    %s87 = sphi 0, %s87
    %s89 = sphi 0, %s87
    %s90 = sphi 0, %s89
    %s104 = sphi 0, %s90
    %s108 = sphi 0, %s108
    %s110 = sphi 0, %s108
    %s111 = sphi 0, %s110
    %s125 = sphi 0, %s111
    %s131 = sphi 0, %s133
    %s134 = sphi 0, %s131
    %s135 = sphi 0, %s134
    %s151 = sphi 0, %s135
  $region4: #{tpu_custom_call.1} parent=0 // loop_header_branch
    %14 = sbr.rel (%p12) target = $region8
  $region5: #{tpu_custom_call.1} parent=0 // loop_body
    %s16 = ssub.s32 %s11, 1
    %s17 = ssub.s32 %s11, 2
    %s18 = sadd.s32 %s11, 1
    %s19 = ssub.s32 %s11, %s18
    %p20 = scmp.eq.s32.totalorder %s19, 0
    %s22 = sadd.s32 %s21, 1
    %s23 = scalar_select %p20, %s21, %s22
    %p26 = pneg %p20
    %p27 = scmp.eq.s32.totalorder %s11, 1
    %p28 = por %p26, %p27
    %p29 = scmp.ne.s32.totalorder %s21, %s24
    %p30 = scmp.eq.s32.totalorder %s11, 0
    %p31 = por %p29, %p30
    %p32 = scmp.ne.s32.totalorder %s21, %s24
    %p33 = scmp.eq.s32.totalorder %s16, 1
    %p34 = por %p32, %p33
    %p35 = scmp.ne.s32.totalorder %s24, %s25
    %p36 = scmp.eq.s32.totalorder %s16, 0
    %p37 = por %p35, %p36
    %p38 = scmp.ne.s32.totalorder %s24, %s25
    %p39 = scmp.eq.s32.totalorder %s17, 1
    %p40 = por %p38, %p39
    %p42 = scmp.ne.s32.totalorder %s25, %s41
    %p43 = scmp.eq.s32.totalorder %s17, 0
    %p44 = por %p42, %p43
    %s46 = sadd.s32 %s45, 1
    %p49 = scmp.eq.s32.totalorder %s11, 1
    %p50 = scmp.ne.s32.totalorder %s45, %s47
    %p51 = scmp.eq.s32.totalorder %s11, 0
    %p52 = por %p50, %p51
    %p53 = scmp.ne.s32.totalorder %s45, %s47
    %p54 = scmp.eq.s32.totalorder %s16, 1
    %p55 = por %p53, %p54
    %p56 = scmp.ne.s32.totalorder %s47, %s48
    %p57 = scmp.eq.s32.totalorder %s16, 0
    %p58 = por %p56, %p57
    %p59 = scmp.ne.s32.totalorder %s47, %s48
    %p60 = scmp.eq.s32.totalorder %s17, 1
    %p61 = por %p59, %p60
    %p63 = scmp.ne.s32.totalorder %s48, %s62
    %p64 = scmp.eq.s32.totalorder %s17, 0
    %p65 = por %p63, %p64
    %s67 = sadd.s32 %s66, 1
    %p70 = scmp.eq.s32.totalorder %s11, 1
    %p71 = scmp.ne.s32.totalorder %s66, %s68
    %p72 = scmp.eq.s32.totalorder %s11, 0
    %p73 = por %p71, %p72
    %p74 = scmp.ne.s32.totalorder %s66, %s68
    %p75 = scmp.eq.s32.totalorder %s16, 1
    %p76 = por %p74, %p75
    %p77 = scmp.ne.s32.totalorder %s68, %s69
    %p78 = scmp.eq.s32.totalorder %s16, 0
    %p79 = por %p77, %p78
    %p80 = scmp.ne.s32.totalorder %s68, %s69
    %p81 = scmp.eq.s32.totalorder %s17, 1
    %p82 = por %p80, %p81
    %p84 = scmp.ne.s32.totalorder %s69, %s83
    %p85 = scmp.eq.s32.totalorder %s17, 0
    %p86 = por %p84, %p85
    %s88 = sadd.s32 %s87, 1
    %p91 = scmp.eq.s32.totalorder %s11, 1
    %p92 = scmp.ne.s32.totalorder %s87, %s89
    %p93 = scmp.eq.s32.totalorder %s11, 0
    %p94 = por %p92, %p93
    %p95 = scmp.ne.s32.totalorder %s87, %s89
    %p96 = scmp.eq.s32.totalorder %s16, 1
    %p97 = por %p95, %p96
    %p98 = scmp.ne.s32.totalorder %s89, %s90
    %p99 = scmp.eq.s32.totalorder %s16, 0
    %p100 = por %p98, %p99
    %p101 = scmp.ne.s32.totalorder %s89, %s90
    %p102 = scmp.eq.s32.totalorder %s17, 1
    %p103 = por %p101, %p102
    %p105 = scmp.ne.s32.totalorder %s90, %s104
    %p106 = scmp.eq.s32.totalorder %s17, 0
    %p107 = por %p105, %p106
    %s109 = sadd.s32 %s108, 1
    %p112 = scmp.eq.s32.totalorder %s11, 1
    %p113 = scmp.ne.s32.totalorder %s108, %s110
    %p114 = scmp.eq.s32.totalorder %s11, 0
    %p115 = por %p113, %p114
    %p116 = scmp.ne.s32.totalorder %s108, %s110
    %p117 = scmp.eq.s32.totalorder %s16, 1
    %p118 = por %p116, %p117
    %p119 = scmp.ne.s32.totalorder %s110, %s111
    %p120 = scmp.eq.s32.totalorder %s16, 0
    %p121 = por %p119, %p120
    %p122 = scmp.ne.s32.totalorder %s110, %s111
    %p123 = scmp.eq.s32.totalorder %s17, 1
    %p124 = por %p122, %p123
    %p126 = scmp.ne.s32.totalorder %s111, %s125
    %p127 = scmp.eq.s32.totalorder %s17, 0
    %p128 = por %p126, %p127
    %s129 = ssub.s32 %s11, %s18
    %p130 = scmp.eq.s32.totalorder %s129, 0
    %s132 = sadd.s32 %s131, 1
    %s133 = scalar_select %p130, %s131, %s132
    %p136 = pneg %p130
    %p137 = scmp.eq.s32.totalorder %s11, 1
    %p138 = por %p136, %p137
    %p139 = scmp.ne.s32.totalorder %s131, %s134
    %p140 = scmp.eq.s32.totalorder %s11, 0
    %p141 = por %p139, %p140
    %p142 = scmp.ne.s32.totalorder %s131, %s134
    %p143 = scmp.eq.s32.totalorder %s16, 1
    %p144 = por %p142, %p143
    %p145 = scmp.ne.s32.totalorder %s134, %s135
    %p146 = scmp.eq.s32.totalorder %s16, 0
    %p147 = por %p145, %p146
    %p148 = scmp.ne.s32.totalorder %s134, %s135
    %p149 = scmp.eq.s32.totalorder %s17, 1
    %p150 = por %p148, %p149
    %p152 = scmp.ne.s32.totalorder %s135, %s151
    %p153 = scmp.eq.s32.totalorder %s17, 0
    %p154 = por %p152, %p153
    %p155 = scmp.le.s32.totalorder 1, %s11
    %p156 = scmp.lt.s32.totalorder %s11, 3
    %p157 = pnand %p155, %p156
    %p158 = pneg %p157
    // Predicated region
    $region9: #{tpu_custom_call.1} parent=5 // pred_check
      _
    $region10: #{tpu_custom_call.1} parent=5 // pred_check_branch
      %160 = sbr.rel (%p157) target = $region12
    $region11: #{tpu_custom_call.1} parent=5 // pred_region
      %s161 = ssub.s32 %s11, 1
      // Predicated region
      $region13: #{tpu_custom_call.1} parent=11 // pred_check
        %p162 = pneg %p58
      $region14: #{tpu_custom_call.1} parent=11 // pred_check_branch
        %164 = sbr.rel (%p162) target = $region16
      $region15: #{tpu_custom_call.1} parent=11 // pred_region
        _
      $region16: #{tpu_custom_call.1} parent=11 // pred_fallthru
        _
      // Predicated region
      $region17: #{tpu_custom_call.1} parent=11 // pred_check
        %p165 = pneg %p79
      $region18: #{tpu_custom_call.1} parent=11 // pred_check_branch
        %167 = sbr.rel (%p165) target = $region20
      $region19: #{tpu_custom_call.1} parent=11 // pred_region
        _
      $region20: #{tpu_custom_call.1} parent=11 // pred_fallthru
        _
      // Predicated region
      $region21: #{tpu_custom_call.1} parent=11 // pred_check
        %p168 = pneg %p100
      $region22: #{tpu_custom_call.1} parent=11 // pred_check_branch
        %170 = sbr.rel (%p168) target = $region24
      $region23: #{tpu_custom_call.1} parent=11 // pred_region
        _
      $region24: #{tpu_custom_call.1} parent=11 // pred_fallthru
        _
      // Predicated region
      $region25: #{tpu_custom_call.1} parent=11 // pred_check
        %p171 = pneg %p121
      $region26: #{tpu_custom_call.1} parent=11 // pred_check_branch
        %173 = sbr.rel (%p171) target = $region28
      $region27: #{tpu_custom_call.1} parent=11 // pred_region
        _
      $region28: #{tpu_custom_call.1} parent=11 // pred_fallthru
        _
    $region12: #{tpu_custom_call.1} parent=5 // pred_fallthru
      _
    %p174 = scmp.lt.s32.totalorder %s11, 2
    // Predicated region
    $region29: #{tpu_custom_call.1} parent=5 // pred_check
      %p175 = pneg %p174
    $region30: #{tpu_custom_call.1} parent=5 // pred_check_branch
      %177 = sbr.rel (%p175) target = $region32
    $region31: #{tpu_custom_call.1} parent=5 // pred_region
      // Predicated region
      $region33: #{tpu_custom_call.1} parent=31 // pred_check
        %p178 = pneg %p31
      $region34: #{tpu_custom_call.1} parent=31 // pred_check_branch
        %180 = sbr.rel (%p178) target = $region36
      $region35: #{tpu_custom_call.1} parent=31 // pred_region
        %s181 = smul.u32 32, %s11
        %p182 = scmp.lt.s32.totalorder %s181, 63
        %s183 = scalar_select %p182, %s181, 63
        %s184 = smul.addr %s183, 8
        %s185 = scalar_lea.vmem %s0, %s184
        %s186 = smul.u32 32, %s11
      $region36: #{tpu_custom_call.1} parent=31 // pred_fallthru
        _
    $region32: #{tpu_custom_call.1} parent=5 // pred_fallthru
      _
    %p187 = scmp.le.s32.totalorder 1, %s11
    %p188 = scmp.lt.s32.totalorder %s11, 3
    %p189 = pnand %p187, %p188
    %p190 = pneg %p189
    // Predicated region
    $region37: #{tpu_custom_call.1} parent=5 // pred_check
      _
    $region38: #{tpu_custom_call.1} parent=5 // pred_check_branch
      %192 = sbr.rel (%p189) target = $region40
    $region39: #{tpu_custom_call.1} parent=5 // pred_region
      %s193 = ssub.s32 %s11, 1
      %s194 = smul.u32 32, %s16
      %p195 = scmp.lt.s32.totalorder %s194, 63
      %s196 = scalar_select %p195, %s194, 63
      %s197 = smul.addr %s196, 8
      %s198 = scalar_lea.vmem %s0, %s197
      %p199 = pneg %p37
      %p200 = pneg %p34
      %p201 = pneg %p58
      %p202 = pneg %p55
      %p203 = pneg %p79
      %p204 = pneg %p76
      %p205 = pneg %p100
      %p206 = pneg %p97
      %p207 = pneg %p121
      %p208 = pneg %p118
      %p209 = pneg %p147
      %p210 = pneg %p144
      %s211 = smul.u32 32, %s16
      %p212 = scmp.lt.s32.totalorder %s211, 63
      %s213 = scalar_select %p212, %s211, 63
      %s214 = smul.addr %s213, 8
      %s215 = scalar_lea.vmem %s5, %s214
      %s216 = smul.u32 32, %s16
      %p217 = scmp.lt.s32.totalorder %s216, 63
      %s218 = scalar_select %p217, %s216, 63
      %s219 = smul.addr %s218, 8
      %s220 = scalar_lea.vmem %s0, %s219
      %s221 = smul.u32 32, %s16
      %s222 = smul.u32 32, %s16
      %p223 = scmp.lt.s32.totalorder %s222, 63
      %s224 = scalar_select %p223, %s222, 63
      %s225 = smul.addr %s224, 8
      %s226 = scalar_lea.vmem %s5, %s225
      %s227 = smul.u32 32, %s16
      %v229 = vld [vmem:[%s1] sm:$0xff]
      %v230 = vld [vmem:[%s220] sm:$0xff]
      %v231 = vld [vmem:[%s220 + $0x8] sm:$0xff]
      %v232 = vld [vmem:[%s220 + $0x10] sm:$0xff]
      %v233 = vld [vmem:[%s220 + $0x18] sm:$0xff]
      %v234 = vld [vmem:[%s220 + $0x20] sm:$0xff]
      %v235 = vld [vmem:[%s220 + $0x28] sm:$0xff]
      %v236 = vld [vmem:[%s220 + $0x30] sm:$0xff]
      %v237 = vld [vmem:[%s220 + $0x38] sm:$0xff]
      %v238 = vld [vmem:[%s220 + $0x40] sm:$0xff]
      %v239 = vld [vmem:[%s220 + $0x48] sm:$0xff]
      %v240 = vld [vmem:[%s220 + $0x50] sm:$0xff]
      %v241 = vld [vmem:[%s220 + $0x58] sm:$0xff]
      %v242 = vld [vmem:[%s220 + $0x60] sm:$0xff]
      %v243 = vld [vmem:[%s220 + $0x68] sm:$0xff]
      %v244 = vld [vmem:[%s220 + $0x70] sm:$0xff]
      %v245 = vld [vmem:[%s220 + $0x78] sm:$0xff]
      %v246 = vld [vmem:[%s220 + $0x80] sm:$0xff]
      %v247 = vld [vmem:[%s220 + $0x88] sm:$0xff]
      %v248 = vld [vmem:[%s220 + $0x90] sm:$0xff]
      %v249 = vld [vmem:[%s220 + $0x98] sm:$0xff]
      %v250 = vld [vmem:[%s220 + $0xa0] sm:$0xff]
      %v251 = vld [vmem:[%s220 + $0xa8] sm:$0xff]
      %v252 = vld [vmem:[%s220 + $0xb0] sm:$0xff]
      %v253 = vld [vmem:[%s220 + $0xb8] sm:$0xff]
      %v254 = vld [vmem:[%s220 + $0xc0] sm:$0xff]
      %v255 = vld [vmem:[%s220 + $0xc8] sm:$0xff]
      %v256 = vld [vmem:[%s220 + $0xd0] sm:$0xff]
      %v257 = vld [vmem:[%s220 + $0xd8] sm:$0xff]
      %v258 = vld [vmem:[%s220 + $0xe0] sm:$0xff]
      %v259 = vld [vmem:[%s220 + $0xe8] sm:$0xff]
      %v260 = vld [vmem:[%s220 + $0xf0] sm:$0xff]
      %v261 = vld [vmem:[%s220 + $0xf8] sm:$0xff]
      %vm262 = vcmask 261120
      %v263 = vsel %vm262, %v230, 0.0
      %264 = vadd.xlane.f32.xlu0 %v263
      %v265 = vpop.xlane.xlu0 %264
      %v266 = vsel %vm262, %v231, 0.0
      %267 = vadd.xlane.f32.xlu0 %v266
      %v268 = vpop.xlane.xlu0 %267
      %v269 = vsel %vm262, %v232, 0.0
      %270 = vadd.xlane.f32.xlu0 %v269
      %v271 = vpop.xlane.xlu0 %270
      %v272 = vsel %vm262, %v233, 0.0
      %273 = vadd.xlane.f32.xlu0 %v272
      %v274 = vpop.xlane.xlu0 %273
      %v275 = vsel %vm262, %v234, 0.0
      %276 = vadd.xlane.f32.xlu0 %v275
      %v277 = vpop.xlane.xlu0 %276
      %v278 = vsel %vm262, %v235, 0.0
      %279 = vadd.xlane.f32.xlu0 %v278
      %v280 = vpop.xlane.xlu0 %279
      %v281 = vsel %vm262, %v236, 0.0
      %282 = vadd.xlane.f32.xlu0 %v281
      %v283 = vpop.xlane.xlu0 %282
      %v284 = vsel %vm262, %v237, 0.0
      %285 = vadd.xlane.f32.xlu0 %v284
      %v286 = vpop.xlane.xlu0 %285
      %v287 = vsel %vm262, %v238, 0.0
      %288 = vadd.xlane.f32.xlu0 %v287
      %v289 = vpop.xlane.xlu0 %288
      %v290 = vsel %vm262, %v239, 0.0
      %291 = vadd.xlane.f32.xlu0 %v290
      %v292 = vpop.xlane.xlu0 %291
      %v293 = vsel %vm262, %v240, 0.0
      %294 = vadd.xlane.f32.xlu0 %v293
      %v295 = vpop.xlane.xlu0 %294
      %v296 = vsel %vm262, %v241, 0.0
      %297 = vadd.xlane.f32.xlu0 %v296
      %v298 = vpop.xlane.xlu0 %297
      %v299 = vsel %vm262, %v242, 0.0
      %300 = vadd.xlane.f32.xlu0 %v299
      %v301 = vpop.xlane.xlu0 %300
      %v302 = vsel %vm262, %v243, 0.0
      %303 = vadd.xlane.f32.xlu0 %v302
      %v304 = vpop.xlane.xlu0 %303
      %v305 = vsel %vm262, %v244, 0.0
      %306 = vadd.xlane.f32.xlu0 %v305
      %v307 = vpop.xlane.xlu0 %306
      %v308 = vsel %vm262, %v245, 0.0
      %309 = vadd.xlane.f32.xlu0 %v308
      %v310 = vpop.xlane.xlu0 %309
      %v311 = vsel %vm262, %v246, 0.0
      %312 = vadd.xlane.f32.xlu0 %v311
      %v313 = vpop.xlane.xlu0 %312
      %v314 = vsel %vm262, %v247, 0.0
      %315 = vadd.xlane.f32.xlu0 %v314
      %v316 = vpop.xlane.xlu0 %315
      %v317 = vsel %vm262, %v248, 0.0
      %318 = vadd.xlane.f32.xlu0 %v317
      %v319 = vpop.xlane.xlu0 %318
      %v320 = vsel %vm262, %v249, 0.0
      %321 = vadd.xlane.f32.xlu0 %v320
      %v322 = vpop.xlane.xlu0 %321
      %v323 = vsel %vm262, %v250, 0.0
      %324 = vadd.xlane.f32.xlu0 %v323
      %v325 = vpop.xlane.xlu0 %324
      %v326 = vsel %vm262, %v251, 0.0
      %327 = vadd.xlane.f32.xlu0 %v326
      %v328 = vpop.xlane.xlu0 %327
      %v329 = vsel %vm262, %v252, 0.0
      %330 = vadd.xlane.f32.xlu0 %v329
      %v331 = vpop.xlane.xlu0 %330
      %v332 = vsel %vm262, %v253, 0.0
      %333 = vadd.xlane.f32.xlu0 %v332
      %v334 = vpop.xlane.xlu0 %333
      %v335 = vsel %vm262, %v254, 0.0
      %336 = vadd.xlane.f32.xlu0 %v335
      %v337 = vpop.xlane.xlu0 %336
      %v338 = vsel %vm262, %v255, 0.0
      %339 = vadd.xlane.f32.xlu0 %v338
      %v340 = vpop.xlane.xlu0 %339
      %v341 = vsel %vm262, %v256, 0.0
      %342 = vadd.xlane.f32.xlu0 %v341
      %v343 = vpop.xlane.xlu0 %342
      %v344 = vsel %vm262, %v257, 0.0
      %345 = vadd.xlane.f32.xlu0 %v344
      %v346 = vpop.xlane.xlu0 %345
      %v347 = vsel %vm262, %v258, 0.0
      %348 = vadd.xlane.f32.xlu0 %v347
      %v349 = vpop.xlane.xlu0 %348
      %v350 = vsel %vm262, %v259, 0.0
      %351 = vadd.xlane.f32.xlu0 %v350
      %v352 = vpop.xlane.xlu0 %351
      %v353 = vsel %vm262, %v260, 0.0
      %354 = vadd.xlane.f32.xlu0 %v353
      %v355 = vpop.xlane.xlu0 %354
      %v356 = vsel %vm262, %v261, 0.0
      %357 = vadd.xlane.f32.xlu0 %v356
      %v358 = vpop.xlane.xlu0 %357
      %v359 = vrcp.pop 32.0
      %v360 = vmul.f32 32.0, %v359
      %v361 = vsub.f32 1.0, %v360
      %v362 = vmul.f32 %v359, %v361
      %v363 = vadd.f32 %v359, %v362
      %vm364 = vweird.f32 %v359
      %v365 = vsel %vm364, %v359, %v363
      %v366 = vmul.f32 %v265, %v365
      %v367 = vmul.f32 %v268, %v365
      %v368 = vmul.f32 %v271, %v365
      %v369 = vmul.f32 %v274, %v365
      %v370 = vmul.f32 %v277, %v365
      %v371 = vmul.f32 %v280, %v365
      %v372 = vmul.f32 %v283, %v365
      %v373 = vmul.f32 %v286, %v365
      %v374 = vmul.f32 %v289, %v365
      %v375 = vmul.f32 %v292, %v365
      %v376 = vmul.f32 %v295, %v365
      %v377 = vmul.f32 %v298, %v365
      %v378 = vmul.f32 %v301, %v365
      %v379 = vmul.f32 %v304, %v365
      %v380 = vmul.f32 %v307, %v365
      %v381 = vmul.f32 %v310, %v365
      %v382 = vmul.f32 %v313, %v365
      %v383 = vmul.f32 %v316, %v365
      %v384 = vmul.f32 %v319, %v365
      %v385 = vmul.f32 %v322, %v365
      %v386 = vmul.f32 %v325, %v365
      %v387 = vmul.f32 %v328, %v365
      %v388 = vmul.f32 %v331, %v365
      %v389 = vmul.f32 %v334, %v365
      %v390 = vmul.f32 %v337, %v365
      %v391 = vmul.f32 %v340, %v365
      %v392 = vmul.f32 %v343, %v365
      %v393 = vmul.f32 %v346, %v365
      %v394 = vmul.f32 %v349, %v365
      %v395 = vmul.f32 %v352, %v365
      %v396 = vmul.f32 %v355, %v365
      %v397 = vmul.f32 %v358, %v365
      %v398 = vsub.f32 %v230, %v366
      %v399 = vsub.f32 %v231, %v367
      %v400 = vsub.f32 %v232, %v368
      %v401 = vsub.f32 %v233, %v369
      %v402 = vsub.f32 %v234, %v370
      %v403 = vsub.f32 %v235, %v371
      %v404 = vsub.f32 %v236, %v372
      %v405 = vsub.f32 %v237, %v373
      %v406 = vsub.f32 %v238, %v374
      %v407 = vsub.f32 %v239, %v375
      %v408 = vsub.f32 %v240, %v376
      %v409 = vsub.f32 %v241, %v377
      %v410 = vsub.f32 %v242, %v378
      %v411 = vsub.f32 %v243, %v379
      %v412 = vsub.f32 %v244, %v380
      %v413 = vsub.f32 %v245, %v381
      %v414 = vsub.f32 %v246, %v382
      %v415 = vsub.f32 %v247, %v383
      %v416 = vsub.f32 %v248, %v384
      %v417 = vsub.f32 %v249, %v385
      %v418 = vsub.f32 %v250, %v386
      %v419 = vsub.f32 %v251, %v387
      %v420 = vsub.f32 %v252, %v388
      %v421 = vsub.f32 %v253, %v389
      %v422 = vsub.f32 %v254, %v390
      %v423 = vsub.f32 %v255, %v391
      %v424 = vsub.f32 %v256, %v392
      %v425 = vsub.f32 %v257, %v393
      %v426 = vsub.f32 %v258, %v394
      %v427 = vsub.f32 %v259, %v395
      %v428 = vsub.f32 %v260, %v396
      %v429 = vsub.f32 %v261, %v397
      %v430 = vmul.f32 %v398, %v398
      %v431 = vmul.f32 %v399, %v399
      %v432 = vmul.f32 %v400, %v400
      %v433 = vmul.f32 %v401, %v401
      %v434 = vmul.f32 %v402, %v402
      %v435 = vmul.f32 %v403, %v403
      %v436 = vmul.f32 %v404, %v404
      %v437 = vmul.f32 %v405, %v405
      %v438 = vmul.f32 %v406, %v406
      %v439 = vmul.f32 %v407, %v407
      %v440 = vmul.f32 %v408, %v408
      %v441 = vmul.f32 %v409, %v409
      %v442 = vmul.f32 %v410, %v410
      %v443 = vmul.f32 %v411, %v411
      %v444 = vmul.f32 %v412, %v412
      %v445 = vmul.f32 %v413, %v413
      %v446 = vmul.f32 %v414, %v414
      %v447 = vmul.f32 %v415, %v415
      %v448 = vmul.f32 %v416, %v416
      %v449 = vmul.f32 %v417, %v417
      %v450 = vmul.f32 %v418, %v418
      %v451 = vmul.f32 %v419, %v419
      %v452 = vmul.f32 %v420, %v420
      %v453 = vmul.f32 %v421, %v421
      %v454 = vmul.f32 %v422, %v422
      %v455 = vmul.f32 %v423, %v423
      %v456 = vmul.f32 %v424, %v424
      %v457 = vmul.f32 %v425, %v425
      %v458 = vmul.f32 %v426, %v426
      %v459 = vmul.f32 %v427, %v427
      %v460 = vmul.f32 %v428, %v428
      %v461 = vmul.f32 %v429, %v429
      %v462 = vsel %vm262, %v430, 0.0
      %463 = vadd.xlane.f32.xlu0 %v462
      %v464 = vpop.xlane.xlu0 %463
      %v465 = vsel %vm262, %v431, 0.0
      %466 = vadd.xlane.f32.xlu0 %v465
      %v467 = vpop.xlane.xlu0 %466
      %v468 = vsel %vm262, %v432, 0.0
      %469 = vadd.xlane.f32.xlu0 %v468
      %v470 = vpop.xlane.xlu0 %469
      %v471 = vsel %vm262, %v433, 0.0
      %472 = vadd.xlane.f32.xlu0 %v471
      %v473 = vpop.xlane.xlu0 %472
      %v474 = vsel %vm262, %v434, 0.0
      %475 = vadd.xlane.f32.xlu0 %v474
      %v476 = vpop.xlane.xlu0 %475
      %v477 = vsel %vm262, %v435, 0.0
      %478 = vadd.xlane.f32.xlu0 %v477
      %v479 = vpop.xlane.xlu0 %478
      %v480 = vsel %vm262, %v436, 0.0
      %481 = vadd.xlane.f32.xlu0 %v480
      %v482 = vpop.xlane.xlu0 %481
      %v483 = vsel %vm262, %v437, 0.0
      %484 = vadd.xlane.f32.xlu0 %v483
      %v485 = vpop.xlane.xlu0 %484
      %v486 = vsel %vm262, %v438, 0.0
      %487 = vadd.xlane.f32.xlu0 %v486
      %v488 = vpop.xlane.xlu0 %487
      %v489 = vsel %vm262, %v439, 0.0
      %490 = vadd.xlane.f32.xlu0 %v489
      %v491 = vpop.xlane.xlu0 %490
      %v492 = vsel %vm262, %v440, 0.0
      %493 = vadd.xlane.f32.xlu0 %v492
      %v494 = vpop.xlane.xlu0 %493
      %v495 = vsel %vm262, %v441, 0.0
      %496 = vadd.xlane.f32.xlu0 %v495
      %v497 = vpop.xlane.xlu0 %496
      %v498 = vsel %vm262, %v442, 0.0
      %499 = vadd.xlane.f32.xlu0 %v498
      %v500 = vpop.xlane.xlu0 %499
      %v501 = vsel %vm262, %v443, 0.0
      %502 = vadd.xlane.f32.xlu0 %v501
      %v503 = vpop.xlane.xlu0 %502
      %v504 = vsel %vm262, %v444, 0.0
      %505 = vadd.xlane.f32.xlu0 %v504
      %v506 = vpop.xlane.xlu0 %505
      %v507 = vsel %vm262, %v445, 0.0
      %508 = vadd.xlane.f32.xlu0 %v507
      %v509 = vpop.xlane.xlu0 %508
      %v510 = vsel %vm262, %v446, 0.0
      %511 = vadd.xlane.f32.xlu0 %v510
      %v512 = vpop.xlane.xlu0 %511
      %v513 = vsel %vm262, %v447, 0.0
      %514 = vadd.xlane.f32.xlu0 %v513
      %v515 = vpop.xlane.xlu0 %514
      %v516 = vsel %vm262, %v448, 0.0
      %517 = vadd.xlane.f32.xlu0 %v516
      %v518 = vpop.xlane.xlu0 %517
      %v519 = vsel %vm262, %v449, 0.0
      %520 = vadd.xlane.f32.xlu0 %v519
      %v521 = vpop.xlane.xlu0 %520
      %v522 = vsel %vm262, %v450, 0.0
      %523 = vadd.xlane.f32.xlu0 %v522
      %v524 = vpop.xlane.xlu0 %523
      %v525 = vsel %vm262, %v451, 0.0
      %526 = vadd.xlane.f32.xlu0 %v525
      %v527 = vpop.xlane.xlu0 %526
      %v528 = vsel %vm262, %v452, 0.0
      %529 = vadd.xlane.f32.xlu0 %v528
      %v530 = vpop.xlane.xlu0 %529
      %v531 = vsel %vm262, %v453, 0.0
      %532 = vadd.xlane.f32.xlu0 %v531
      %v533 = vpop.xlane.xlu0 %532
      %v534 = vsel %vm262, %v454, 0.0
      %535 = vadd.xlane.f32.xlu0 %v534
      %v536 = vpop.xlane.xlu0 %535
      %v537 = vsel %vm262, %v455, 0.0
      %538 = vadd.xlane.f32.xlu0 %v537
      %v539 = vpop.xlane.xlu0 %538
      %v540 = vsel %vm262, %v456, 0.0
      %541 = vadd.xlane.f32.xlu0 %v540
      %v542 = vpop.xlane.xlu0 %541
      %v543 = vsel %vm262, %v457, 0.0
      %544 = vadd.xlane.f32.xlu0 %v543
      %v545 = vpop.xlane.xlu0 %544
      %v546 = vsel %vm262, %v458, 0.0
      %547 = vadd.xlane.f32.xlu0 %v546
      %v548 = vpop.xlane.xlu0 %547
      %v549 = vsel %vm262, %v459, 0.0
      %550 = vadd.xlane.f32.xlu0 %v549
      %v551 = vpop.xlane.xlu0 %550
      %v552 = vsel %vm262, %v460, 0.0
      %553 = vadd.xlane.f32.xlu0 %v552
      %v554 = vpop.xlane.xlu0 %553
      %v555 = vsel %vm262, %v461, 0.0
      %556 = vadd.xlane.f32.xlu0 %v555
      %v557 = vpop.xlane.xlu0 %556
      %v558 = vmul.f32 %v464, %v365
      %v559 = vmul.f32 %v467, %v365
      %v560 = vmul.f32 %v470, %v365
      %v561 = vmul.f32 %v473, %v365
      %v562 = vmul.f32 %v476, %v365
      %v563 = vmul.f32 %v479, %v365
      %v564 = vmul.f32 %v482, %v365
      %v565 = vmul.f32 %v485, %v365
      %v566 = vmul.f32 %v488, %v365
      %v567 = vmul.f32 %v491, %v365
      %v568 = vmul.f32 %v494, %v365
      %v569 = vmul.f32 %v497, %v365
      %v570 = vmul.f32 %v500, %v365
      %v571 = vmul.f32 %v503, %v365
      %v572 = vmul.f32 %v506, %v365
      %v573 = vmul.f32 %v509, %v365
      %v574 = vmul.f32 %v512, %v365
      %v575 = vmul.f32 %v515, %v365
      %v576 = vmul.f32 %v518, %v365
      %v577 = vmul.f32 %v521, %v365
      %v578 = vmul.f32 %v524, %v365
      %v579 = vmul.f32 %v527, %v365
      %v580 = vmul.f32 %v530, %v365
      %v581 = vmul.f32 %v533, %v365
      %v582 = vmul.f32 %v536, %v365
      %v583 = vmul.f32 %v539, %v365
      %v584 = vmul.f32 %v542, %v365
      %v585 = vmul.f32 %v545, %v365
      %v586 = vmul.f32 %v548, %v365
      %v587 = vmul.f32 %v551, %v365
      %v588 = vmul.f32 %v554, %v365
      %v589 = vmul.f32 %v557, %v365
      %v590 = vadd.f32 %v558, 1e-05
      %v591 = vadd.f32 %v559, 1e-05
      %v592 = vadd.f32 %v560, 1e-05
      %v593 = vadd.f32 %v561, 1e-05
      %v594 = vadd.f32 %v562, 1e-05
      %v595 = vadd.f32 %v563, 1e-05
      %v596 = vadd.f32 %v564, 1e-05
      %v597 = vadd.f32 %v565, 1e-05
      %v598 = vadd.f32 %v566, 1e-05
      %v599 = vadd.f32 %v567, 1e-05
      %v600 = vadd.f32 %v568, 1e-05
      %v601 = vadd.f32 %v569, 1e-05
      %v602 = vadd.f32 %v570, 1e-05
      %v603 = vadd.f32 %v571, 1e-05
      %v604 = vadd.f32 %v572, 1e-05
      %v605 = vadd.f32 %v573, 1e-05
      %v606 = vadd.f32 %v574, 1e-05
      %v607 = vadd.f32 %v575, 1e-05
      %v608 = vadd.f32 %v576, 1e-05
      %v609 = vadd.f32 %v577, 1e-05
      %v610 = vadd.f32 %v578, 1e-05
      %v611 = vadd.f32 %v579, 1e-05
      %v612 = vadd.f32 %v580, 1e-05
      %v613 = vadd.f32 %v581, 1e-05
      %v614 = vadd.f32 %v582, 1e-05
      %v615 = vadd.f32 %v583, 1e-05
      %v616 = vadd.f32 %v584, 1e-05
      %v617 = vadd.f32 %v585, 1e-05
      %v618 = vadd.f32 %v586, 1e-05
      %v619 = vadd.f32 %v587, 1e-05
      %v620 = vadd.f32 %v588, 1e-05
      %v621 = vadd.f32 %v589, 1e-05
      %v622 = vrsqrt.pop %v590
      %v623 = vmul.f32 %v622, %v590
      %v624 = vmul.f32 %v623, %v622
      %v625 = vmul.f32 0.5, %v624
      %v626 = vsub.f32 1.5, %v625
      %v627 = vmul.f32 %v622, %v626
      %vm628 = vweird.f32 %v590
      %vm629 = vweird.f32 %v622
      %vm630 = vmor %vm628, %vm629
      %v631 = vsel %vm630, %v622, %v627
      %v632 = vrsqrt.pop %v591
      %v633 = vmul.f32 %v632, %v591
      %v634 = vmul.f32 %v633, %v632
      %v635 = vmul.f32 0.5, %v634
      %v636 = vsub.f32 1.5, %v635
      %v637 = vmul.f32 %v632, %v636
      %vm638 = vweird.f32 %v591
      %vm639 = vweird.f32 %v632
      %vm640 = vmor %vm638, %vm639
      %v641 = vsel %vm640, %v632, %v637
      %v642 = vrsqrt.pop %v592
      %v643 = vmul.f32 %v642, %v592
      %v644 = vmul.f32 %v643, %v642
      %v645 = vmul.f32 0.5, %v644
      %v646 = vsub.f32 1.5, %v645
      %v647 = vmul.f32 %v642, %v646
      %vm648 = vweird.f32 %v592
      %vm649 = vweird.f32 %v642
      %vm650 = vmor %vm648, %vm649
      %v651 = vsel %vm650, %v642, %v647
      %v652 = vrsqrt.pop %v593
      %v653 = vmul.f32 %v652, %v593
      %v654 = vmul.f32 %v653, %v652
      %v655 = vmul.f32 0.5, %v654
      %v656 = vsub.f32 1.5, %v655
      %v657 = vmul.f32 %v652, %v656
      %vm658 = vweird.f32 %v593
      %vm659 = vweird.f32 %v652
      %vm660 = vmor %vm658, %vm659
      %v661 = vsel %vm660, %v652, %v657
      %v662 = vrsqrt.pop %v594
      %v663 = vmul.f32 %v662, %v594
      %v664 = vmul.f32 %v663, %v662
      %v665 = vmul.f32 0.5, %v664
      %v666 = vsub.f32 1.5, %v665
      %v667 = vmul.f32 %v662, %v666
      %vm668 = vweird.f32 %v594
      %vm669 = vweird.f32 %v662
      %vm670 = vmor %vm668, %vm669
      %v671 = vsel %vm670, %v662, %v667
      %v672 = vrsqrt.pop %v595
      %v673 = vmul.f32 %v672, %v595
      %v674 = vmul.f32 %v673, %v672
      %v675 = vmul.f32 0.5, %v674
      %v676 = vsub.f32 1.5, %v675
      %v677 = vmul.f32 %v672, %v676
      %vm678 = vweird.f32 %v595
      %vm679 = vweird.f32 %v672
      %vm680 = vmor %vm678, %vm679
      %v681 = vsel %vm680, %v672, %v677
      %v682 = vrsqrt.pop %v596
      %v683 = vmul.f32 %v682, %v596
      %v684 = vmul.f32 %v683, %v682
      %v685 = vmul.f32 0.5, %v684
      %v686 = vsub.f32 1.5, %v685
      %v687 = vmul.f32 %v682, %v686
      %vm688 = vweird.f32 %v596
      %vm689 = vweird.f32 %v682
      %vm690 = vmor %vm688, %vm689
      %v691 = vsel %vm690, %v682, %v687
      %v692 = vrsqrt.pop %v597
      %v693 = vmul.f32 %v692, %v597
      %v694 = vmul.f32 %v693, %v692
      %v695 = vmul.f32 0.5, %v694
      %v696 = vsub.f32 1.5, %v695
      %v697 = vmul.f32 %v692, %v696
      %vm698 = vweird.f32 %v597
      %vm699 = vweird.f32 %v692
      %vm700 = vmor %vm698, %vm699
      %v701 = vsel %vm700, %v692, %v697
      %v702 = vrsqrt.pop %v598
      %v703 = vmul.f32 %v702, %v598
      %v704 = vmul.f32 %v703, %v702
      %v705 = vmul.f32 0.5, %v704
      %v706 = vsub.f32 1.5, %v705
      %v707 = vmul.f32 %v702, %v706
      %vm708 = vweird.f32 %v598
      %vm709 = vweird.f32 %v702
      %vm710 = vmor %vm708, %vm709
      %v711 = vsel %vm710, %v702, %v707
      %v712 = vrsqrt.pop %v599
      %v713 = vmul.f32 %v712, %v599
      %v714 = vmul.f32 %v713, %v712
      %v715 = vmul.f32 0.5, %v714
      %v716 = vsub.f32 1.5, %v715
      %v717 = vmul.f32 %v712, %v716
      %vm718 = vweird.f32 %v599
      %vm719 = vweird.f32 %v712
      %vm720 = vmor %vm718, %vm719
      %v721 = vsel %vm720, %v712, %v717
      %v722 = vrsqrt.pop %v600
      %v723 = vmul.f32 %v722, %v600
      %v724 = vmul.f32 %v723, %v722
      %v725 = vmul.f32 0.5, %v724
      %v726 = vsub.f32 1.5, %v725
      %v727 = vmul.f32 %v722, %v726
      %vm728 = vweird.f32 %v600
      %vm729 = vweird.f32 %v722
      %vm730 = vmor %vm728, %vm729
      %v731 = vsel %vm730, %v722, %v727
      %v732 = vrsqrt.pop %v601
      %v733 = vmul.f32 %v732, %v601
      %v734 = vmul.f32 %v733, %v732
      %v735 = vmul.f32 0.5, %v734
      %v736 = vsub.f32 1.5, %v735
      %v737 = vmul.f32 %v732, %v736
      %vm738 = vweird.f32 %v601
      %vm739 = vweird.f32 %v732
      %vm740 = vmor %vm738, %vm739
      %v741 = vsel %vm740, %v732, %v737
      %v742 = vrsqrt.pop %v602
      %v743 = vmul.f32 %v742, %v602
      %v744 = vmul.f32 %v743, %v742
      %v745 = vmul.f32 0.5, %v744
      %v746 = vsub.f32 1.5, %v745
      %v747 = vmul.f32 %v742, %v746
      %vm748 = vweird.f32 %v602
      %vm749 = vweird.f32 %v742
      %vm750 = vmor %vm748, %vm749
      %v751 = vsel %vm750, %v742, %v747
      %v752 = vrsqrt.pop %v603
      %v753 = vmul.f32 %v752, %v603
      %v754 = vmul.f32 %v753, %v752
      %v755 = vmul.f32 0.5, %v754
      %v756 = vsub.f32 1.5, %v755
      %v757 = vmul.f32 %v752, %v756
      %vm758 = vweird.f32 %v603
      %vm759 = vweird.f32 %v752
      %vm760 = vmor %vm758, %vm759
      %v761 = vsel %vm760, %v752, %v757
      %v762 = vrsqrt.pop %v604
      %v763 = vmul.f32 %v762, %v604
      %v764 = vmul.f32 %v763, %v762
      %v765 = vmul.f32 0.5, %v764
      %v766 = vsub.f32 1.5, %v765
      %v767 = vmul.f32 %v762, %v766
      %vm768 = vweird.f32 %v604
      %vm769 = vweird.f32 %v762
      %vm770 = vmor %vm768, %vm769
      %v771 = vsel %vm770, %v762, %v767
      %v772 = vrsqrt.pop %v605
      %v773 = vmul.f32 %v772, %v605
      %v774 = vmul.f32 %v773, %v772
      %v775 = vmul.f32 0.5, %v774
      %v776 = vsub.f32 1.5, %v775
      %v777 = vmul.f32 %v772, %v776
      %vm778 = vweird.f32 %v605
      %vm779 = vweird.f32 %v772
      %vm780 = vmor %vm778, %vm779
      %v781 = vsel %vm780, %v772, %v777
      %v782 = vrsqrt.pop %v606
      %v783 = vmul.f32 %v782, %v606
      %v784 = vmul.f32 %v783, %v782
      %v785 = vmul.f32 0.5, %v784
      %v786 = vsub.f32 1.5, %v785
      %v787 = vmul.f32 %v782, %v786
      %vm788 = vweird.f32 %v606
      %vm789 = vweird.f32 %v782
      %vm790 = vmor %vm788, %vm789
      %v791 = vsel %vm790, %v782, %v787
      %v792 = vrsqrt.pop %v607
      %v793 = vmul.f32 %v792, %v607
      %v794 = vmul.f32 %v793, %v792
      %v795 = vmul.f32 0.5, %v794
      %v796 = vsub.f32 1.5, %v795
      %v797 = vmul.f32 %v792, %v796
      %vm798 = vweird.f32 %v607
      %vm799 = vweird.f32 %v792
      %vm800 = vmor %vm798, %vm799
      %v801 = vsel %vm800, %v792, %v797
      %v802 = vrsqrt.pop %v608
      %v803 = vmul.f32 %v802, %v608
      %v804 = vmul.f32 %v803, %v802
      %v805 = vmul.f32 0.5, %v804
      %v806 = vsub.f32 1.5, %v805
      %v807 = vmul.f32 %v802, %v806
      %vm808 = vweird.f32 %v608
      %vm809 = vweird.f32 %v802
      %vm810 = vmor %vm808, %vm809
      %v811 = vsel %vm810, %v802, %v807
      %v812 = vrsqrt.pop %v609
      %v813 = vmul.f32 %v812, %v609
      %v814 = vmul.f32 %v813, %v812
      %v815 = vmul.f32 0.5, %v814
      %v816 = vsub.f32 1.5, %v815
      %v817 = vmul.f32 %v812, %v816
      %vm818 = vweird.f32 %v609
      %vm819 = vweird.f32 %v812
      %vm820 = vmor %vm818, %vm819
      %v821 = vsel %vm820, %v812, %v817
      %v822 = vrsqrt.pop %v610
      %v823 = vmul.f32 %v822, %v610
      %v824 = vmul.f32 %v823, %v822
      %v825 = vmul.f32 0.5, %v824
      %v826 = vsub.f32 1.5, %v825
      %v827 = vmul.f32 %v822, %v826
      %vm828 = vweird.f32 %v610
      %vm829 = vweird.f32 %v822
      %vm830 = vmor %vm828, %vm829
      %v831 = vsel %vm830, %v822, %v827
      %v832 = vrsqrt.pop %v611
      %v833 = vmul.f32 %v832, %v611
      %v834 = vmul.f32 %v833, %v832
      %v835 = vmul.f32 0.5, %v834
      %v836 = vsub.f32 1.5, %v835
      %v837 = vmul.f32 %v832, %v836
      %vm838 = vweird.f32 %v611
      %vm839 = vweird.f32 %v832
      %vm840 = vmor %vm838, %vm839
      %v841 = vsel %vm840, %v832, %v837
      %v842 = vrsqrt.pop %v612
      %v843 = vmul.f32 %v842, %v612
      %v844 = vmul.f32 %v843, %v842
      %v845 = vmul.f32 0.5, %v844
      %v846 = vsub.f32 1.5, %v845
      %v847 = vmul.f32 %v842, %v846
      %vm848 = vweird.f32 %v612
      %vm849 = vweird.f32 %v842
      %vm850 = vmor %vm848, %vm849
      %v851 = vsel %vm850, %v842, %v847
      %v852 = vrsqrt.pop %v613
      %v853 = vmul.f32 %v852, %v613
      %v854 = vmul.f32 %v853, %v852
      %v855 = vmul.f32 0.5, %v854
      %v856 = vsub.f32 1.5, %v855
      %v857 = vmul.f32 %v852, %v856
      %vm858 = vweird.f32 %v613
      %vm859 = vweird.f32 %v852
      %vm860 = vmor %vm858, %vm859
      %v861 = vsel %vm860, %v852, %v857
      %v862 = vrsqrt.pop %v614
      %v863 = vmul.f32 %v862, %v614
      %v864 = vmul.f32 %v863, %v862
      %v865 = vmul.f32 0.5, %v864
      %v866 = vsub.f32 1.5, %v865
      %v867 = vmul.f32 %v862, %v866
      %vm868 = vweird.f32 %v614
      %vm869 = vweird.f32 %v862
      %vm870 = vmor %vm868, %vm869
      %v871 = vsel %vm870, %v862, %v867
      %v872 = vrsqrt.pop %v615
      %v873 = vmul.f32 %v872, %v615
      %v874 = vmul.f32 %v873, %v872
      %v875 = vmul.f32 0.5, %v874
      %v876 = vsub.f32 1.5, %v875
      %v877 = vmul.f32 %v872, %v876
      %vm878 = vweird.f32 %v615
      %vm879 = vweird.f32 %v872
      %vm880 = vmor %vm878, %vm879
      %v881 = vsel %vm880, %v872, %v877
      %v882 = vrsqrt.pop %v616
      %v883 = vmul.f32 %v882, %v616
      %v884 = vmul.f32 %v883, %v882
      %v885 = vmul.f32 0.5, %v884
      %v886 = vsub.f32 1.5, %v885
      %v887 = vmul.f32 %v882, %v886
      %vm888 = vweird.f32 %v616
      %vm889 = vweird.f32 %v882
      %vm890 = vmor %vm888, %vm889
      %v891 = vsel %vm890, %v882, %v887
      %v892 = vrsqrt.pop %v617
      %v893 = vmul.f32 %v892, %v617
      %v894 = vmul.f32 %v893, %v892
      %v895 = vmul.f32 0.5, %v894
      %v896 = vsub.f32 1.5, %v895
      %v897 = vmul.f32 %v892, %v896
      %vm898 = vweird.f32 %v617
      %vm899 = vweird.f32 %v892
      %vm900 = vmor %vm898, %vm899
      %v901 = vsel %vm900, %v892, %v897
      %v902 = vrsqrt.pop %v618
      %v903 = vmul.f32 %v902, %v618
      %v904 = vmul.f32 %v903, %v902
      %v905 = vmul.f32 0.5, %v904
      %v906 = vsub.f32 1.5, %v905
      %v907 = vmul.f32 %v902, %v906
      %vm908 = vweird.f32 %v618
      %vm909 = vweird.f32 %v902
      %vm910 = vmor %vm908, %vm909
      %v911 = vsel %vm910, %v902, %v907
      %v912 = vrsqrt.pop %v619
      %v913 = vmul.f32 %v912, %v619
      %v914 = vmul.f32 %v913, %v912
      %v915 = vmul.f32 0.5, %v914
      %v916 = vsub.f32 1.5, %v915
      %v917 = vmul.f32 %v912, %v916
      %vm918 = vweird.f32 %v619
      %vm919 = vweird.f32 %v912
      %vm920 = vmor %vm918, %vm919
      %v921 = vsel %vm920, %v912, %v917
      %v922 = vrsqrt.pop %v620
      %v923 = vmul.f32 %v922, %v620
      %v924 = vmul.f32 %v923, %v922
      %v925 = vmul.f32 0.5, %v924
      %v926 = vsub.f32 1.5, %v925
      %v927 = vmul.f32 %v922, %v926
      %vm928 = vweird.f32 %v620
      %vm929 = vweird.f32 %v922
      %vm930 = vmor %vm928, %vm929
      %v931 = vsel %vm930, %v922, %v927
      %v932 = vrsqrt.pop %v621
      %v933 = vmul.f32 %v932, %v621
      %v934 = vmul.f32 %v933, %v932
      %v935 = vmul.f32 0.5, %v934
      %v936 = vsub.f32 1.5, %v935
      %v937 = vmul.f32 %v932, %v936
      %vm938 = vweird.f32 %v621
      %vm939 = vweird.f32 %v932
      %vm940 = vmor %vm938, %vm939
      %v941 = vsel %vm940, %v932, %v937
      %v942 = vmul.f32 %v398, %v631
      %v943 = vmul.f32 %v399, %v641
      %v944 = vmul.f32 %v400, %v651
      %v945 = vmul.f32 %v401, %v661
      %v946 = vmul.f32 %v402, %v671
      %v947 = vmul.f32 %v403, %v681
      %v948 = vmul.f32 %v404, %v691
      %v949 = vmul.f32 %v405, %v701
      %v950 = vmul.f32 %v406, %v711
      %v951 = vmul.f32 %v407, %v721
      %v952 = vmul.f32 %v408, %v731
      %v953 = vmul.f32 %v409, %v741
      %v954 = vmul.f32 %v410, %v751
      %v955 = vmul.f32 %v411, %v761
      %v956 = vmul.f32 %v412, %v771
      %v957 = vmul.f32 %v413, %v781
      %v958 = vmul.f32 %v414, %v791
      %v959 = vmul.f32 %v415, %v801
      %v960 = vmul.f32 %v416, %v811
      %v961 = vmul.f32 %v417, %v821
      %v962 = vmul.f32 %v418, %v831
      %v963 = vmul.f32 %v419, %v841
      %v964 = vmul.f32 %v420, %v851
      %v965 = vmul.f32 %v421, %v861
      %v966 = vmul.f32 %v422, %v871
      %v967 = vmul.f32 %v423, %v881
      %v968 = vmul.f32 %v424, %v891
      %v969 = vmul.f32 %v425, %v901
      %v970 = vmul.f32 %v426, %v911
      %v971 = vmul.f32 %v427, %v921
      %v972 = vmul.f32 %v428, %v931
      %v973 = vmul.f32 %v429, %v941
      %v974 = vperm.slane %v229, 0
      %v975 = vmul.f32 %v942, %v974
      %v976 = vmul.f32 %v943, %v974
      %v977 = vmul.f32 %v944, %v974
      %v978 = vmul.f32 %v945, %v974
      %v979 = vmul.f32 %v946, %v974
      %v980 = vmul.f32 %v947, %v974
      %v981 = vmul.f32 %v948, %v974
      %v982 = vmul.f32 %v949, %v974
      %v983 = vmul.f32 %v950, %v974
      %v984 = vmul.f32 %v951, %v974
      %v985 = vmul.f32 %v952, %v974
      %v986 = vmul.f32 %v953, %v974
      %v987 = vmul.f32 %v954, %v974
      %v988 = vmul.f32 %v955, %v974
      %v989 = vmul.f32 %v956, %v974
      %v990 = vmul.f32 %v957, %v974
      %v991 = vmul.f32 %v958, %v974
      %v992 = vmul.f32 %v959, %v974
      %v993 = vmul.f32 %v960, %v974
      %v994 = vmul.f32 %v961, %v974
      %v995 = vmul.f32 %v962, %v974
      %v996 = vmul.f32 %v963, %v974
      %v997 = vmul.f32 %v964, %v974
      %v998 = vmul.f32 %v965, %v974
      %v999 = vmul.f32 %v966, %v974
      %v1000 = vmul.f32 %v967, %v974
      %v1001 = vmul.f32 %v968, %v974
      %v1002 = vmul.f32 %v969, %v974
      %v1003 = vmul.f32 %v970, %v974
      %v1004 = vmul.f32 %v971, %v974
      %v1005 = vmul.f32 %v972, %v974
      %v1006 = vmul.f32 %v973, %v974
      %v1007 = vperm.slane %v229, 1
      %v1008 = vadd.f32 %v975, %v1007
      %v1009 = vadd.f32 %v976, %v1007
      %v1010 = vadd.f32 %v977, %v1007
      %v1011 = vadd.f32 %v978, %v1007
      %v1012 = vadd.f32 %v979, %v1007
      %v1013 = vadd.f32 %v980, %v1007
      %v1014 = vadd.f32 %v981, %v1007
      %v1015 = vadd.f32 %v982, %v1007
      %v1016 = vadd.f32 %v983, %v1007
      %v1017 = vadd.f32 %v984, %v1007
      %v1018 = vadd.f32 %v985, %v1007
      %v1019 = vadd.f32 %v986, %v1007
      %v1020 = vadd.f32 %v987, %v1007
      %v1021 = vadd.f32 %v988, %v1007
      %v1022 = vadd.f32 %v989, %v1007
      %v1023 = vadd.f32 %v990, %v1007
      %v1024 = vadd.f32 %v991, %v1007
      %v1025 = vadd.f32 %v992, %v1007
      %v1026 = vadd.f32 %v993, %v1007
      %v1027 = vadd.f32 %v994, %v1007
      %v1028 = vadd.f32 %v995, %v1007
      %v1029 = vadd.f32 %v996, %v1007
      %v1030 = vadd.f32 %v997, %v1007
      %v1031 = vadd.f32 %v998, %v1007
      %v1032 = vadd.f32 %v999, %v1007
      %v1033 = vadd.f32 %v1000, %v1007
      %v1034 = vadd.f32 %v1001, %v1007
      %v1035 = vadd.f32 %v1002, %v1007
      %v1036 = vadd.f32 %v1003, %v1007
      %v1037 = vadd.f32 %v1004, %v1007
      %v1038 = vadd.f32 %v1005, %v1007
      %v1039 = vadd.f32 %v1006, %v1007
      %v1040 = vpack.c.bf16 %v1009, %v1008
      %v1041 = vpack.c.bf16 %v1011, %v1010
      %v1042 = vpack.c.bf16 %v1013, %v1012
      %v1043 = vpack.c.bf16 %v1015, %v1014
      %v1044 = vpack.c.bf16 %v1017, %v1016
      %v1045 = vpack.c.bf16 %v1019, %v1018
      %v1046 = vpack.c.bf16 %v1021, %v1020
      %v1047 = vpack.c.bf16 %v1023, %v1022
      %v1048 = vpack.c.bf16 %v1025, %v1024
      %v1049 = vpack.c.bf16 %v1027, %v1026
      %v1050 = vpack.c.bf16 %v1029, %v1028
      %v1051 = vpack.c.bf16 %v1031, %v1030
      %v1052 = vpack.c.bf16 %v1033, %v1032
      %v1053 = vpack.c.bf16 %v1035, %v1034
      %v1054 = vpack.c.bf16 %v1037, %v1036
      %v1055 = vpack.c.bf16 %v1039, %v1038
      %v1056 = vld [vmem:[%s2] sm:$0xf]
      %v1057 = vld [vmem:[%s2 + $0x4] sm:$0xf]
      %v1058 = vld [vmem:[%s2 + $0x8] sm:$0xf]
      %v1059 = vld [vmem:[%s2 + $0xc] sm:$0xf]
      %v1064 = vunpack.c.l.b16 %v1056
      %v1065 = vunpack.c.l.b16 %v1057
      %v1066 = vunpack.c.l.b16 %v1058
      %v1067 = vunpack.c.l.b16 %v1059
      %v1068 = vpack.c.b16 %v1065, %v1064
      %v1069 = vpack.c.b16 %v1067, %v1066
      %v1073 = vsel %vm262, %v1040, 0
      %v1076 = vsel %vm262, %v1041, 0
      %v1079 = vsel %vm262, %v1042, 0
      %v1082 = vsel %vm262, %v1043, 0
      %v1085 = vsel %vm262, %v1044, 0
      %v1088 = vsel %vm262, %v1045, 0
      %v1091 = vsel %vm262, %v1046, 0
      %v1094 = vsel %vm262, %v1047, 0
      %v1097 = vsel %vm262, %v1048, 0
      %v1100 = vsel %vm262, %v1049, 0
      %v1103 = vsel %vm262, %v1050, 0
      %v1106 = vsel %vm262, %v1051, 0
      %v1109 = vsel %vm262, %v1052, 0
      %v1112 = vsel %vm262, %v1053, 0
      %v1115 = vsel %vm262, %v1054, 0
      %v1118 = vsel %vm262, %v1055, 0
      %1120 = vmatpush.bf16.msra.mxu0 0
      %1121 = vmatpush.bf16.msra.mxu0 0
      %1122 = vmatpush.bf16.msra.mxu0 0
      %1123 = vmatpush.bf16.msra.mxu0 0
      %1124 = vmatpush.bf16.msra.mxu0 0
      %1125 = vmatpush.bf16.msra.mxu0 0
      %1126 = vmatpush.bf16.msra.mxu0 %v1069
      %1127 = vmatpush.bf16.msra.mxu0 %v1068
      %1128 = vmatmul.bf16.gmra.mxu0 %v1073
      %v1129 = vpop.f32.mrf.mxu0
      %v1130 = vadd.f32 0.0, %v1129
      %v1131 = vpop.f32.mrf.mxu0
      %v1132 = vadd.f32 0.0, %v1131
      %1133 = vmatmul.bf16.gmra.mxu0 %v1076
      %v1134 = vpop.f32.mrf.mxu0
      %v1135 = vadd.f32 0.0, %v1134
      %v1136 = vpop.f32.mrf.mxu0
      %v1137 = vadd.f32 0.0, %v1136
      %1138 = vmatmul.bf16.gmra.mxu0 %v1079
      %v1139 = vpop.f32.mrf.mxu0
      %v1140 = vadd.f32 0.0, %v1139
      %v1141 = vpop.f32.mrf.mxu0
      %v1142 = vadd.f32 0.0, %v1141
      %1143 = vmatmul.bf16.gmra.mxu0 %v1082
      %v1144 = vpop.f32.mrf.mxu0
      %v1145 = vadd.f32 0.0, %v1144
      %v1146 = vpop.f32.mrf.mxu0
      %v1147 = vadd.f32 0.0, %v1146
      %1148 = vmatmul.bf16.gmra.mxu0 %v1085
      %v1149 = vpop.f32.mrf.mxu0
      %v1150 = vadd.f32 0.0, %v1149
      %v1151 = vpop.f32.mrf.mxu0
      %v1152 = vadd.f32 0.0, %v1151
      %1153 = vmatmul.bf16.gmra.mxu0 %v1088
      %v1154 = vpop.f32.mrf.mxu0
      %v1155 = vadd.f32 0.0, %v1154
      %v1156 = vpop.f32.mrf.mxu0
      %v1157 = vadd.f32 0.0, %v1156
      %1158 = vmatmul.bf16.gmra.mxu0 %v1091
      %v1159 = vpop.f32.mrf.mxu0
      %v1160 = vadd.f32 0.0, %v1159
      %v1161 = vpop.f32.mrf.mxu0
      %v1162 = vadd.f32 0.0, %v1161
      %1163 = vmatmul.bf16.gmra.mxu0 %v1094
      %v1164 = vpop.f32.mrf.mxu0
      %v1165 = vadd.f32 0.0, %v1164
      %v1166 = vpop.f32.mrf.mxu0
      %v1167 = vadd.f32 0.0, %v1166
      %1168 = vmatmul.bf16.gmra.mxu0 %v1097
      %v1169 = vpop.f32.mrf.mxu0
      %v1170 = vadd.f32 0.0, %v1169
      %v1171 = vpop.f32.mrf.mxu0
      %v1172 = vadd.f32 0.0, %v1171
      %1173 = vmatmul.bf16.gmra.mxu0 %v1100
      %v1174 = vpop.f32.mrf.mxu0
      %v1175 = vadd.f32 0.0, %v1174
      %v1176 = vpop.f32.mrf.mxu0
      %v1177 = vadd.f32 0.0, %v1176
      %1178 = vmatmul.bf16.gmra.mxu0 %v1103
      %v1179 = vpop.f32.mrf.mxu0
      %v1180 = vadd.f32 0.0, %v1179
      %v1181 = vpop.f32.mrf.mxu0
      %v1182 = vadd.f32 0.0, %v1181
      %1183 = vmatmul.bf16.gmra.mxu0 %v1106
      %v1184 = vpop.f32.mrf.mxu0
      %v1185 = vadd.f32 0.0, %v1184
      %v1186 = vpop.f32.mrf.mxu0
      %v1187 = vadd.f32 0.0, %v1186
      %1188 = vmatmul.bf16.gmra.mxu0 %v1109
      %v1189 = vpop.f32.mrf.mxu0
      %v1190 = vadd.f32 0.0, %v1189
      %v1191 = vpop.f32.mrf.mxu0
      %v1192 = vadd.f32 0.0, %v1191
      %1193 = vmatmul.bf16.gmra.mxu0 %v1112
      %v1194 = vpop.f32.mrf.mxu0
      %v1195 = vadd.f32 0.0, %v1194
      %v1196 = vpop.f32.mrf.mxu0
      %v1197 = vadd.f32 0.0, %v1196
      %1198 = vmatmul.bf16.gmra.mxu0 %v1115
      %v1199 = vpop.f32.mrf.mxu0
      %v1200 = vadd.f32 0.0, %v1199
      %v1201 = vpop.f32.mrf.mxu0
      %v1202 = vadd.f32 0.0, %v1201
      %1203 = vmatmul.bf16.gmra.mxu0 %v1118
      %v1204 = vpop.f32.mrf.mxu0
      %v1205 = vadd.f32 0.0, %v1204
      %v1206 = vpop.f32.mrf.mxu0
      %v1207 = vadd.f32 0.0, %v1206
      %1208 = vdwg.mxu0
      %v1209 = vperm.slane %v229, 2
      %v1210 = vadd.f32 %v1130, %v1209
      %v1211 = vadd.f32 %v1132, %v1209
      %v1212 = vadd.f32 %v1135, %v1209
      %v1213 = vadd.f32 %v1137, %v1209
      %v1214 = vadd.f32 %v1140, %v1209
      %v1215 = vadd.f32 %v1142, %v1209
      %v1216 = vadd.f32 %v1145, %v1209
      %v1217 = vadd.f32 %v1147, %v1209
      %v1218 = vadd.f32 %v1150, %v1209
      %v1219 = vadd.f32 %v1152, %v1209
      %v1220 = vadd.f32 %v1155, %v1209
      %v1221 = vadd.f32 %v1157, %v1209
      %v1222 = vadd.f32 %v1160, %v1209
      %v1223 = vadd.f32 %v1162, %v1209
      %v1224 = vadd.f32 %v1165, %v1209
      %v1225 = vadd.f32 %v1167, %v1209
      %v1226 = vadd.f32 %v1170, %v1209
      %v1227 = vadd.f32 %v1172, %v1209
      %v1228 = vadd.f32 %v1175, %v1209
      %v1229 = vadd.f32 %v1177, %v1209
      %v1230 = vadd.f32 %v1180, %v1209
      %v1231 = vadd.f32 %v1182, %v1209
      %v1232 = vadd.f32 %v1185, %v1209
      %v1233 = vadd.f32 %v1187, %v1209
      %v1234 = vadd.f32 %v1190, %v1209
      %v1235 = vadd.f32 %v1192, %v1209
      %v1236 = vadd.f32 %v1195, %v1209
      %v1237 = vadd.f32 %v1197, %v1209
      %v1238 = vadd.f32 %v1200, %v1209
      %v1239 = vadd.f32 %v1202, %v1209
      %v1240 = vadd.f32 %v1205, %v1209
      %v1241 = vadd.f32 %v1207, %v1209
      %v1242 = vperm.slane %v229, 3
      %1244 = vrot.lane.b32.xlu0 %v1242, 64
      %v1245 = vpop.permute.xlu0 %1244
      %v1247 = vadd.f32 %v1130, %v1245
      %v1248 = vadd.f32 %v1132, %v1245
      %v1249 = vadd.f32 %v1135, %v1245
      %v1250 = vadd.f32 %v1137, %v1245
      %v1251 = vadd.f32 %v1140, %v1245
      %v1252 = vadd.f32 %v1142, %v1245
      %v1253 = vadd.f32 %v1145, %v1245
      %v1254 = vadd.f32 %v1147, %v1245
      %v1255 = vadd.f32 %v1150, %v1245
      %v1256 = vadd.f32 %v1152, %v1245
      %v1257 = vadd.f32 %v1155, %v1245
      %v1258 = vadd.f32 %v1157, %v1245
      %v1259 = vadd.f32 %v1160, %v1245
      %v1260 = vadd.f32 %v1162, %v1245
      %v1261 = vadd.f32 %v1165, %v1245
      %v1262 = vadd.f32 %v1167, %v1245
      %v1263 = vadd.f32 %v1170, %v1245
      %v1264 = vadd.f32 %v1172, %v1245
      %v1265 = vadd.f32 %v1175, %v1245
      %v1266 = vadd.f32 %v1177, %v1245
      %v1267 = vadd.f32 %v1180, %v1245
      %v1268 = vadd.f32 %v1182, %v1245
      %v1269 = vadd.f32 %v1185, %v1245
      %v1270 = vadd.f32 %v1187, %v1245
      %v1271 = vadd.f32 %v1190, %v1245
      %v1272 = vadd.f32 %v1192, %v1245
      %v1273 = vadd.f32 %v1195, %v1245
      %v1274 = vadd.f32 %v1197, %v1245
      %v1275 = vadd.f32 %v1200, %v1245
      %v1276 = vadd.f32 %v1202, %v1245
      %v1277 = vadd.f32 %v1205, %v1245
      %v1278 = vadd.f32 %v1207, %v1245
      %v1279 = vpack.c.bf16 %v1210, %v1210
      %v1280 = vpack.c.bf16 %v1211, %v1211
      %v1281 = vpack.c.bf16 %v1212, %v1212
      %v1282 = vpack.c.bf16 %v1213, %v1213
      %v1283 = vpack.c.bf16 %v1214, %v1214
      %v1284 = vpack.c.bf16 %v1215, %v1215
      %v1285 = vpack.c.bf16 %v1216, %v1216
      %v1286 = vpack.c.bf16 %v1217, %v1217
      %v1287 = vpack.c.bf16 %v1218, %v1218
      %v1288 = vpack.c.bf16 %v1219, %v1219
      %v1289 = vpack.c.bf16 %v1220, %v1220
      %v1290 = vpack.c.bf16 %v1221, %v1221
      %v1291 = vpack.c.bf16 %v1222, %v1222
      %v1292 = vpack.c.bf16 %v1223, %v1223
      %v1293 = vpack.c.bf16 %v1224, %v1224
      %v1294 = vpack.c.bf16 %v1225, %v1225
      %v1295 = vpack.c.bf16 %v1226, %v1226
      %v1296 = vpack.c.bf16 %v1227, %v1227
      %v1297 = vpack.c.bf16 %v1228, %v1228
      %v1298 = vpack.c.bf16 %v1229, %v1229
      %v1299 = vpack.c.bf16 %v1230, %v1230
      %v1300 = vpack.c.bf16 %v1231, %v1231
      %v1301 = vpack.c.bf16 %v1232, %v1232
      %v1302 = vpack.c.bf16 %v1233, %v1233
      %v1303 = vpack.c.bf16 %v1234, %v1234
      %v1304 = vpack.c.bf16 %v1235, %v1235
      %v1305 = vpack.c.bf16 %v1236, %v1236
      %v1306 = vpack.c.bf16 %v1237, %v1237
      %v1307 = vpack.c.bf16 %v1238, %v1238
      %v1308 = vpack.c.bf16 %v1239, %v1239
      %v1309 = vpack.c.bf16 %v1240, %v1240
      %v1310 = vpack.c.bf16 %v1241, %v1241
      %v1311 = vpack.c.bf16 %v1130, %v1130
      %v1312 = vpack.c.bf16 %v1132, %v1132
      %v1313 = vpack.c.bf16 %v1135, %v1135
      %v1314 = vpack.c.bf16 %v1137, %v1137
      %v1315 = vpack.c.bf16 %v1140, %v1140
      %v1316 = vpack.c.bf16 %v1142, %v1142
      %v1317 = vpack.c.bf16 %v1145, %v1145
      %v1318 = vpack.c.bf16 %v1147, %v1147
      %v1319 = vpack.c.bf16 %v1150, %v1150
      %v1320 = vpack.c.bf16 %v1152, %v1152
      %v1321 = vpack.c.bf16 %v1155, %v1155
      %v1322 = vpack.c.bf16 %v1157, %v1157
      %v1323 = vpack.c.bf16 %v1160, %v1160
      %v1324 = vpack.c.bf16 %v1162, %v1162
      %v1325 = vpack.c.bf16 %v1165, %v1165
      %v1326 = vpack.c.bf16 %v1167, %v1167
      %v1327 = vpack.c.bf16 %v1170, %v1170
      %v1328 = vpack.c.bf16 %v1172, %v1172
      %v1329 = vpack.c.bf16 %v1175, %v1175
      %v1330 = vpack.c.bf16 %v1177, %v1177
      %v1331 = vpack.c.bf16 %v1180, %v1180
      %v1332 = vpack.c.bf16 %v1182, %v1182
      %v1333 = vpack.c.bf16 %v1185, %v1185
      %v1334 = vpack.c.bf16 %v1187, %v1187
      %v1335 = vpack.c.bf16 %v1190, %v1190
      %v1336 = vpack.c.bf16 %v1192, %v1192
      %v1337 = vpack.c.bf16 %v1195, %v1195
      %v1338 = vpack.c.bf16 %v1197, %v1197
      %v1339 = vpack.c.bf16 %v1200, %v1200
      %v1340 = vpack.c.bf16 %v1202, %v1202
      %v1341 = vpack.c.bf16 %v1205, %v1205
      %v1342 = vpack.c.bf16 %v1207, %v1207
      %v1343 = vpack.c.bf16 %v1247, %v1247
      %v1344 = vpack.c.bf16 %v1248, %v1248
      %v1345 = vpack.c.bf16 %v1249, %v1249
      %v1346 = vpack.c.bf16 %v1250, %v1250
      %v1347 = vpack.c.bf16 %v1251, %v1251
      %v1348 = vpack.c.bf16 %v1252, %v1252
      %v1349 = vpack.c.bf16 %v1253, %v1253
      %v1350 = vpack.c.bf16 %v1254, %v1254
      %v1351 = vpack.c.bf16 %v1255, %v1255
      %v1352 = vpack.c.bf16 %v1256, %v1256
      %v1353 = vpack.c.bf16 %v1257, %v1257
      %v1354 = vpack.c.bf16 %v1258, %v1258
      %v1355 = vpack.c.bf16 %v1259, %v1259
      %v1356 = vpack.c.bf16 %v1260, %v1260
      %v1357 = vpack.c.bf16 %v1261, %v1261
      %v1358 = vpack.c.bf16 %v1262, %v1262
      %v1359 = vpack.c.bf16 %v1263, %v1263
      %v1360 = vpack.c.bf16 %v1264, %v1264
      %v1361 = vpack.c.bf16 %v1265, %v1265
      %v1362 = vpack.c.bf16 %v1266, %v1266
      %v1363 = vpack.c.bf16 %v1267, %v1267
      %v1364 = vpack.c.bf16 %v1268, %v1268
      %v1365 = vpack.c.bf16 %v1269, %v1269
      %v1366 = vpack.c.bf16 %v1270, %v1270
      %v1367 = vpack.c.bf16 %v1271, %v1271
      %v1368 = vpack.c.bf16 %v1272, %v1272
      %v1369 = vpack.c.bf16 %v1273, %v1273
      %v1370 = vpack.c.bf16 %v1274, %v1274
      %v1371 = vpack.c.bf16 %v1275, %v1275
      %v1372 = vpack.c.bf16 %v1276, %v1276
      %v1373 = vpack.c.bf16 %v1277, %v1277
      %v1374 = vpack.c.bf16 %v1278, %v1278
      %v1375 = vld [vmem:[%s4] sm:$0xff]
      %v1376 = vld [vmem:[%s4 + $0x8] sm:$0xff]
      %v1377 = vld [vmem:[%s4 + $0x10] sm:$0xff]
      %v1378 = vld [vmem:[%s4 + $0x18] sm:$0xff]
      %v1379 = vld [vmem:[%s4 + $0x20] sm:$0xff]
      %v1380 = vld [vmem:[%s4 + $0x28] sm:$0xff]
      %v1381 = vld [vmem:[%s4 + $0x30] sm:$0xff]
      %v1382 = vld [vmem:[%s4 + $0x38] sm:$0xff]
      %v1383 = vld [vmem:[%s4 + $0x40] sm:$0xff]
      %v1384 = vld [vmem:[%s4 + $0x48] sm:$0xff]
      %v1385 = vld [vmem:[%s4 + $0x50] sm:$0xff]
      %v1386 = vld [vmem:[%s4 + $0x58] sm:$0xff]
      %v1387 = vld [vmem:[%s4 + $0x60] sm:$0xff]
      %v1388 = vld [vmem:[%s4 + $0x68] sm:$0xff]
      %v1389 = vld [vmem:[%s4 + $0x70] sm:$0xff]
      %v1390 = vld [vmem:[%s4 + $0x78] sm:$0xff]
      %v1391 = vld [vmem:[%s4 + $0x80] sm:$0xff]
      %v1392 = vld [vmem:[%s4 + $0x88] sm:$0xff]
      %v1393 = vld [vmem:[%s4 + $0x90] sm:$0xff]
      %v1394 = vld [vmem:[%s4 + $0x98] sm:$0xff]
      %v1395 = vld [vmem:[%s4 + $0xa0] sm:$0xff]
      %v1396 = vld [vmem:[%s4 + $0xa8] sm:$0xff]
      %v1397 = vld [vmem:[%s4 + $0xb0] sm:$0xff]
      %v1398 = vld [vmem:[%s4 + $0xb8] sm:$0xff]
      %v1399 = vld [vmem:[%s4 + $0xc0] sm:$0xff]
      %v1400 = vld [vmem:[%s4 + $0xc8] sm:$0xff]
      %v1401 = vld [vmem:[%s4 + $0xd0] sm:$0xff]
      %v1402 = vld [vmem:[%s4 + $0xd8] sm:$0xff]
      %v1403 = vld [vmem:[%s4 + $0xe0] sm:$0xff]
      %v1404 = vld [vmem:[%s4 + $0xe8] sm:$0xff]
      %v1405 = vld [vmem:[%s4 + $0xf0] sm:$0xff]
      %v1406 = vld [vmem:[%s4 + $0xf8] sm:$0xff]
      %v1407 = vld [vmem:[%s4 + $0x100] sm:$0xff]
      %v1408 = vld [vmem:[%s4 + $0x108] sm:$0xff]
      %v1409 = vld [vmem:[%s4 + $0x110] sm:$0xff]
      %v1410 = vld [vmem:[%s4 + $0x118] sm:$0xff]
      %v1411 = vld [vmem:[%s4 + $0x120] sm:$0xff]
      %v1412 = vld [vmem:[%s4 + $0x128] sm:$0xff]
      %v1413 = vld [vmem:[%s4 + $0x130] sm:$0xff]
      %v1414 = vld [vmem:[%s4 + $0x138] sm:$0xff]
      %v1415 = vld [vmem:[%s4 + $0x140] sm:$0xff]
      %v1416 = vld [vmem:[%s4 + $0x148] sm:$0xff]
      %v1417 = vld [vmem:[%s4 + $0x150] sm:$0xff]
      %v1418 = vld [vmem:[%s4 + $0x158] sm:$0xff]
      %v1419 = vld [vmem:[%s4 + $0x160] sm:$0xff]
      %v1420 = vld [vmem:[%s4 + $0x168] sm:$0xff]
      %v1421 = vld [vmem:[%s4 + $0x170] sm:$0xff]
      %v1422 = vld [vmem:[%s4 + $0x178] sm:$0xff]
      %v1423 = vld [vmem:[%s4 + $0x180] sm:$0xff]
      %v1424 = vld [vmem:[%s4 + $0x188] sm:$0xff]
      %v1425 = vld [vmem:[%s4 + $0x190] sm:$0xff]
      %v1426 = vld [vmem:[%s4 + $0x198] sm:$0xff]
      %v1427 = vld [vmem:[%s4 + $0x1a0] sm:$0xff]
      %v1428 = vld [vmem:[%s4 + $0x1a8] sm:$0xff]
      %v1429 = vld [vmem:[%s4 + $0x1b0] sm:$0xff]
      %v1430 = vld [vmem:[%s4 + $0x1b8] sm:$0xff]
      %v1431 = vld [vmem:[%s4 + $0x1c0] sm:$0xff]
      %v1432 = vld [vmem:[%s4 + $0x1c8] sm:$0xff]
      %v1433 = vld [vmem:[%s4 + $0x1d0] sm:$0xff]
      %v1434 = vld [vmem:[%s4 + $0x1d8] sm:$0xff]
      %v1435 = vld [vmem:[%s4 + $0x1e0] sm:$0xff]
      %v1436 = vld [vmem:[%s4 + $0x1e8] sm:$0xff]
      %v1437 = vld [vmem:[%s4 + $0x1f0] sm:$0xff]
      %v1438 = vld [vmem:[%s4 + $0x1f8] sm:$0xff]
      %v1471 = vunpack.c.l.b16 %v1279
      %v1472 = vunpack.c.l.b16 %v1280
      %v1473 = vunpack.c.l.b16 %v1281
      %v1474 = vunpack.c.l.b16 %v1282
      %v1475 = vunpack.c.l.b16 %v1283
      %v1476 = vunpack.c.l.b16 %v1284
      %v1477 = vunpack.c.l.b16 %v1285
      %v1478 = vunpack.c.l.b16 %v1286
      %v1479 = vunpack.c.l.b16 %v1287
      %v1480 = vunpack.c.l.b16 %v1288
      %v1481 = vunpack.c.l.b16 %v1289
      %v1482 = vunpack.c.l.b16 %v1290
      %v1483 = vunpack.c.l.b16 %v1291
      %v1484 = vunpack.c.l.b16 %v1292
      %v1485 = vunpack.c.l.b16 %v1293
      %v1486 = vunpack.c.l.b16 %v1294
      %v1487 = vunpack.c.l.b16 %v1295
      %v1488 = vunpack.c.l.b16 %v1296
      %v1489 = vunpack.c.l.b16 %v1297
      %v1490 = vunpack.c.l.b16 %v1298
      %v1491 = vunpack.c.l.b16 %v1299
      %v1492 = vunpack.c.l.b16 %v1300
      %v1493 = vunpack.c.l.b16 %v1301
      %v1494 = vunpack.c.l.b16 %v1302
      %v1495 = vunpack.c.l.b16 %v1303
      %v1496 = vunpack.c.l.b16 %v1304
      %v1497 = vunpack.c.l.b16 %v1305
      %v1498 = vunpack.c.l.b16 %v1306
      %v1499 = vunpack.c.l.b16 %v1307
      %v1500 = vunpack.c.l.b16 %v1308
      %v1501 = vunpack.c.l.b16 %v1309
      %v1502 = vunpack.c.l.b16 %v1310
      %v1503 = vpack.c.b16 %v1472, %v1471
      %v1504 = vpack.c.b16 %v1474, %v1473
      %v1505 = vpack.c.b16 %v1476, %v1475
      %v1506 = vpack.c.b16 %v1478, %v1477
      %v1507 = vpack.c.b16 %v1480, %v1479
      %v1508 = vpack.c.b16 %v1482, %v1481
      %v1509 = vpack.c.b16 %v1484, %v1483
      %v1510 = vpack.c.b16 %v1486, %v1485
      %v1511 = vpack.c.b16 %v1488, %v1487
      %v1512 = vpack.c.b16 %v1490, %v1489
      %v1513 = vpack.c.b16 %v1492, %v1491
      %v1514 = vpack.c.b16 %v1494, %v1493
      %v1515 = vpack.c.b16 %v1496, %v1495
      %v1516 = vpack.c.b16 %v1498, %v1497
      %v1517 = vpack.c.b16 %v1500, %v1499
      %v1518 = vpack.c.b16 %v1502, %v1501
      %v1551 = vunpack.c.l.b16 %v1311
      %v1552 = vunpack.c.l.b16 %v1312
      %v1553 = vunpack.c.l.b16 %v1313
      %v1554 = vunpack.c.l.b16 %v1314
      %v1555 = vunpack.c.l.b16 %v1315
      %v1556 = vunpack.c.l.b16 %v1316
      %v1557 = vunpack.c.l.b16 %v1317
      %v1558 = vunpack.c.l.b16 %v1318
      %v1559 = vunpack.c.l.b16 %v1319
      %v1560 = vunpack.c.l.b16 %v1320
      %v1561 = vunpack.c.l.b16 %v1321
      %v1562 = vunpack.c.l.b16 %v1322
      %v1563 = vunpack.c.l.b16 %v1323
      %v1564 = vunpack.c.l.b16 %v1324
      %v1565 = vunpack.c.l.b16 %v1325
      %v1566 = vunpack.c.l.b16 %v1326
      %v1567 = vunpack.c.l.b16 %v1327
      %v1568 = vunpack.c.l.b16 %v1328
      %v1569 = vunpack.c.l.b16 %v1329
      %v1570 = vunpack.c.l.b16 %v1330
      %v1571 = vunpack.c.l.b16 %v1331
      %v1572 = vunpack.c.l.b16 %v1332
      %v1573 = vunpack.c.l.b16 %v1333
      %v1574 = vunpack.c.l.b16 %v1334
      %v1575 = vunpack.c.l.b16 %v1335
      %v1576 = vunpack.c.l.b16 %v1336
      %v1577 = vunpack.c.l.b16 %v1337
      %v1578 = vunpack.c.l.b16 %v1338
      %v1579 = vunpack.c.l.b16 %v1339
      %v1580 = vunpack.c.l.b16 %v1340
      %v1581 = vunpack.c.l.b16 %v1341
      %v1582 = vunpack.c.l.b16 %v1342
      %v1583 = vpack.c.b16 %v1552, %v1551
      %v1584 = vpack.c.b16 %v1554, %v1553
      %v1585 = vpack.c.b16 %v1556, %v1555
      %v1586 = vpack.c.b16 %v1558, %v1557
      %v1587 = vpack.c.b16 %v1560, %v1559
      %v1588 = vpack.c.b16 %v1562, %v1561
      %v1589 = vpack.c.b16 %v1564, %v1563
      %v1590 = vpack.c.b16 %v1566, %v1565
      %v1591 = vpack.c.b16 %v1568, %v1567
      %v1592 = vpack.c.b16 %v1570, %v1569
      %v1593 = vpack.c.b16 %v1572, %v1571
      %v1594 = vpack.c.b16 %v1574, %v1573
      %v1595 = vpack.c.b16 %v1576, %v1575
      %v1596 = vpack.c.b16 %v1578, %v1577
      %v1597 = vpack.c.b16 %v1580, %v1579
      %v1598 = vpack.c.b16 %v1582, %v1581
      %1599 = vrot.lane.b32.xlu0 %v1583, 96
      %v1600 = vpop.permute.xlu0 %1599
      %1601 = vrot.lane.b32.xlu0 %v1584, 96
      %v1602 = vpop.permute.xlu0 %1601
      %1603 = vrot.lane.b32.xlu0 %v1585, 96
      %v1604 = vpop.permute.xlu0 %1603
      %1605 = vrot.lane.b32.xlu0 %v1586, 96
      %v1606 = vpop.permute.xlu0 %1605
      %1607 = vrot.lane.b32.xlu0 %v1587, 96
      %v1608 = vpop.permute.xlu0 %1607
      %1609 = vrot.lane.b32.xlu0 %v1588, 96
      %v1610 = vpop.permute.xlu0 %1609
      %1611 = vrot.lane.b32.xlu0 %v1589, 96
      %v1612 = vpop.permute.xlu0 %1611
      %1613 = vrot.lane.b32.xlu0 %v1590, 96
      %v1614 = vpop.permute.xlu0 %1613
      %1615 = vrot.lane.b32.xlu0 %v1591, 96
      %v1616 = vpop.permute.xlu0 %1615
      %1617 = vrot.lane.b32.xlu0 %v1592, 96
      %v1618 = vpop.permute.xlu0 %1617
      %1619 = vrot.lane.b32.xlu0 %v1593, 96
      %v1620 = vpop.permute.xlu0 %1619
      %1621 = vrot.lane.b32.xlu0 %v1594, 96
      %v1622 = vpop.permute.xlu0 %1621
      %1623 = vrot.lane.b32.xlu0 %v1595, 96
      %v1624 = vpop.permute.xlu0 %1623
      %1625 = vrot.lane.b32.xlu0 %v1596, 96
      %v1626 = vpop.permute.xlu0 %1625
      %1627 = vrot.lane.b32.xlu0 %v1597, 96
      %v1628 = vpop.permute.xlu0 %1627
      %1629 = vrot.lane.b32.xlu0 %v1598, 96
      %v1630 = vpop.permute.xlu0 %1629
      %v1632 = vsel %vm262, %v1503, 0
      %v1635 = vsel %vm262, %v1504, 0
      %v1638 = vsel %vm262, %v1505, 0
      %v1641 = vsel %vm262, %v1506, 0
      %v1644 = vsel %vm262, %v1507, 0
      %v1647 = vsel %vm262, %v1508, 0
      %v1650 = vsel %vm262, %v1509, 0
      %v1653 = vsel %vm262, %v1510, 0
      %v1656 = vsel %vm262, %v1511, 0
      %v1659 = vsel %vm262, %v1512, 0
      %v1662 = vsel %vm262, %v1513, 0
      %v1665 = vsel %vm262, %v1514, 0
      %v1668 = vsel %vm262, %v1515, 0
      %v1671 = vsel %vm262, %v1516, 0
      %v1674 = vsel %vm262, %v1517, 0
      %v1677 = vsel %vm262, %v1518, 0
      %v1680 = vsel %vm262, %v1600, 0
      %v1683 = vsel %vm262, %v1602, 0
      %v1686 = vsel %vm262, %v1604, 0
      %v1689 = vsel %vm262, %v1606, 0
      %v1692 = vsel %vm262, %v1608, 0
      %v1695 = vsel %vm262, %v1610, 0
      %v1698 = vsel %vm262, %v1612, 0
      %v1701 = vsel %vm262, %v1614, 0
      %v1704 = vsel %vm262, %v1616, 0
      %v1707 = vsel %vm262, %v1618, 0
      %v1710 = vsel %vm262, %v1620, 0
      %v1713 = vsel %vm262, %v1622, 0
      %v1716 = vsel %vm262, %v1624, 0
      %v1719 = vsel %vm262, %v1626, 0
      %v1722 = vsel %vm262, %v1628, 0
      %v1725 = vsel %vm262, %v1630, 0
      %1727 = vmatpush.bf16.xpose.msra.mxu0 %v1701
      %1728 = vmatpush.bf16.xpose.msra.mxu0 %v1698
      %1729 = vmatpush.bf16.xpose.msra.mxu0 %v1695
      %1730 = vmatpush.bf16.xpose.msra.mxu0 %v1692
      %1731 = vmatpush.bf16.xpose.msra.mxu0 %v1689
      %1732 = vmatpush.bf16.xpose.msra.mxu0 %v1686
      %1733 = vmatpush.bf16.xpose.msra.mxu0 %v1683
      %1734 = vmatpush.bf16.xpose.msra.mxu0 %v1680
      %1735 = vmatmul.bf16.gmra.mxu0 %v1632
      %v1736 = vpop.f32.mrf.mxu0
      %v1737 = vadd.f32 %v1375, %v1736
      %v1738 = vpop.f32.mrf.mxu0
      %v1739 = vadd.f32 %v1377, %v1738
      %1740 = vmatmul.bf16.gmra.mxu0 %v1635
      %v1741 = vpop.f32.mrf.mxu0
      %v1742 = vadd.f32 %v1379, %v1741
      %v1743 = vpop.f32.mrf.mxu0
      %v1744 = vadd.f32 %v1381, %v1743
      %1745 = vmatmul.bf16.gmra.mxu0 %v1638
      %v1746 = vpop.f32.mrf.mxu0
      %v1747 = vadd.f32 %v1383, %v1746
      %v1748 = vpop.f32.mrf.mxu0
      %v1749 = vadd.f32 %v1385, %v1748
      %1750 = vmatmul.bf16.gmra.mxu0 %v1641
      %v1751 = vpop.f32.mrf.mxu0
      %v1752 = vadd.f32 %v1387, %v1751
      %v1753 = vpop.f32.mrf.mxu0
      %v1754 = vadd.f32 %v1389, %v1753
      %1755 = vmatmul.bf16.gmra.mxu0 %v1644
      %v1756 = vpop.f32.mrf.mxu0
      %v1757 = vadd.f32 %v1391, %v1756
      %v1758 = vpop.f32.mrf.mxu0
      %v1759 = vadd.f32 %v1393, %v1758
      %1760 = vmatmul.bf16.gmra.mxu0 %v1647
      %v1761 = vpop.f32.mrf.mxu0
      %v1762 = vadd.f32 %v1395, %v1761
      %v1763 = vpop.f32.mrf.mxu0
      %v1764 = vadd.f32 %v1397, %v1763
      %1765 = vmatmul.bf16.gmra.mxu0 %v1650
      %v1766 = vpop.f32.mrf.mxu0
      %v1767 = vadd.f32 %v1399, %v1766
      %v1768 = vpop.f32.mrf.mxu0
      %v1769 = vadd.f32 %v1401, %v1768
      %1770 = vmatmul.bf16.gmra.mxu0 %v1653
      %v1771 = vpop.f32.mrf.mxu0
      %v1772 = vadd.f32 %v1403, %v1771
      %v1773 = vpop.f32.mrf.mxu0
      %v1774 = vadd.f32 %v1405, %v1773
      %1775 = vmatmul.bf16.gmra.mxu0 %v1656
      %v1776 = vpop.f32.mrf.mxu0
      %v1777 = vadd.f32 %v1407, %v1776
      %v1778 = vpop.f32.mrf.mxu0
      %v1779 = vadd.f32 %v1409, %v1778
      %1780 = vmatmul.bf16.gmra.mxu0 %v1659
      %v1781 = vpop.f32.mrf.mxu0
      %v1782 = vadd.f32 %v1411, %v1781
      %v1783 = vpop.f32.mrf.mxu0
      %v1784 = vadd.f32 %v1413, %v1783
      %1785 = vmatmul.bf16.gmra.mxu0 %v1662
      %v1786 = vpop.f32.mrf.mxu0
      %v1787 = vadd.f32 %v1415, %v1786
      %v1788 = vpop.f32.mrf.mxu0
      %v1789 = vadd.f32 %v1417, %v1788
      %1790 = vmatmul.bf16.gmra.mxu0 %v1665
      %v1791 = vpop.f32.mrf.mxu0
      %v1792 = vadd.f32 %v1419, %v1791
      %v1793 = vpop.f32.mrf.mxu0
      %v1794 = vadd.f32 %v1421, %v1793
      %1795 = vmatmul.bf16.gmra.mxu0 %v1668
      %v1796 = vpop.f32.mrf.mxu0
      %v1797 = vadd.f32 %v1423, %v1796
      %v1798 = vpop.f32.mrf.mxu0
      %v1799 = vadd.f32 %v1425, %v1798
      %1800 = vmatmul.bf16.gmra.mxu0 %v1671
      %v1801 = vpop.f32.mrf.mxu0
      %v1802 = vadd.f32 %v1427, %v1801
      %v1803 = vpop.f32.mrf.mxu0
      %v1804 = vadd.f32 %v1429, %v1803
      %1805 = vmatmul.bf16.gmra.mxu0 %v1674
      %v1806 = vpop.f32.mrf.mxu0
      %v1807 = vadd.f32 %v1431, %v1806
      %v1808 = vpop.f32.mrf.mxu0
      %v1809 = vadd.f32 %v1433, %v1808
      %1810 = vmatmul.bf16.gmra.mxu0 %v1677
      %v1811 = vpop.f32.mrf.mxu0
      %v1812 = vadd.f32 %v1435, %v1811
      %v1813 = vpop.f32.mrf.mxu0
      %v1814 = vadd.f32 %v1437, %v1813
      %1815 = vdwg.mxu0
      %1816 = vmatpush.bf16.xpose.msra.mxu0 %v1725
      %1817 = vmatpush.bf16.xpose.msra.mxu0 %v1722
      %1818 = vmatpush.bf16.xpose.msra.mxu0 %v1719
      %1819 = vmatpush.bf16.xpose.msra.mxu0 %v1716
      %1820 = vmatpush.bf16.xpose.msra.mxu0 %v1713
      %1821 = vmatpush.bf16.xpose.msra.mxu0 %v1710
      %1822 = vmatpush.bf16.xpose.msra.mxu0 %v1707
      %1823 = vmatpush.bf16.xpose.msra.mxu0 %v1704
      %1824 = vmatmul.bf16.gmra.mxu0 %v1632
      %v1825 = vpop.f32.mrf.mxu0
      %v1826 = vadd.f32 %v1376, %v1825
      %v1827 = vpop.f32.mrf.mxu0
      %v1828 = vadd.f32 %v1378, %v1827
      %1829 = vmatmul.bf16.gmra.mxu0 %v1635
      %v1830 = vpop.f32.mrf.mxu0
      %v1831 = vadd.f32 %v1380, %v1830
      %v1832 = vpop.f32.mrf.mxu0
      %v1833 = vadd.f32 %v1382, %v1832
      %1834 = vmatmul.bf16.gmra.mxu0 %v1638
      %v1835 = vpop.f32.mrf.mxu0
      %v1836 = vadd.f32 %v1384, %v1835
      %v1837 = vpop.f32.mrf.mxu0
      %v1838 = vadd.f32 %v1386, %v1837
      %1839 = vmatmul.bf16.gmra.mxu0 %v1641
      %v1840 = vpop.f32.mrf.mxu0
      %v1841 = vadd.f32 %v1388, %v1840
      %v1842 = vpop.f32.mrf.mxu0
      %v1843 = vadd.f32 %v1390, %v1842
      %1844 = vmatmul.bf16.gmra.mxu0 %v1644
      %v1845 = vpop.f32.mrf.mxu0
      %v1846 = vadd.f32 %v1392, %v1845
      %v1847 = vpop.f32.mrf.mxu0
      %v1848 = vadd.f32 %v1394, %v1847
      %1849 = vmatmul.bf16.gmra.mxu0 %v1647
      %v1850 = vpop.f32.mrf.mxu0
      %v1851 = vadd.f32 %v1396, %v1850
      %v1852 = vpop.f32.mrf.mxu0
      %v1853 = vadd.f32 %v1398, %v1852
      %1854 = vmatmul.bf16.gmra.mxu0 %v1650
      %v1855 = vpop.f32.mrf.mxu0
      %v1856 = vadd.f32 %v1400, %v1855
      %v1857 = vpop.f32.mrf.mxu0
      %v1858 = vadd.f32 %v1402, %v1857
      %1859 = vmatmul.bf16.gmra.mxu0 %v1653
      %v1860 = vpop.f32.mrf.mxu0
      %v1861 = vadd.f32 %v1404, %v1860
      %v1862 = vpop.f32.mrf.mxu0
      %v1863 = vadd.f32 %v1406, %v1862
      %1864 = vmatmul.bf16.gmra.mxu0 %v1656
      %v1865 = vpop.f32.mrf.mxu0
      %v1866 = vadd.f32 %v1408, %v1865
      %v1867 = vpop.f32.mrf.mxu0
      %v1868 = vadd.f32 %v1410, %v1867
      %1869 = vmatmul.bf16.gmra.mxu0 %v1659
      %v1870 = vpop.f32.mrf.mxu0
      %v1871 = vadd.f32 %v1412, %v1870
      %v1872 = vpop.f32.mrf.mxu0
      %v1873 = vadd.f32 %v1414, %v1872
      %1874 = vmatmul.bf16.gmra.mxu0 %v1662
      %v1875 = vpop.f32.mrf.mxu0
      %v1876 = vadd.f32 %v1416, %v1875
      %v1877 = vpop.f32.mrf.mxu0
      %v1878 = vadd.f32 %v1418, %v1877
      %1879 = vmatmul.bf16.gmra.mxu0 %v1665
      %v1880 = vpop.f32.mrf.mxu0
      %v1881 = vadd.f32 %v1420, %v1880
      %v1882 = vpop.f32.mrf.mxu0
      %v1883 = vadd.f32 %v1422, %v1882
      %1884 = vmatmul.bf16.gmra.mxu0 %v1668
      %v1885 = vpop.f32.mrf.mxu0
      %v1886 = vadd.f32 %v1424, %v1885
      %v1887 = vpop.f32.mrf.mxu0
      %v1888 = vadd.f32 %v1426, %v1887
      %1889 = vmatmul.bf16.gmra.mxu0 %v1671
      %v1890 = vpop.f32.mrf.mxu0
      %v1891 = vadd.f32 %v1428, %v1890
      %v1892 = vpop.f32.mrf.mxu0
      %v1893 = vadd.f32 %v1430, %v1892
      %1894 = vmatmul.bf16.gmra.mxu0 %v1674
      %v1895 = vpop.f32.mrf.mxu0
      %v1896 = vadd.f32 %v1432, %v1895
      %v1897 = vpop.f32.mrf.mxu0
      %v1898 = vadd.f32 %v1434, %v1897
      %1899 = vmatmul.bf16.gmra.mxu0 %v1677
      %v1900 = vpop.f32.mrf.mxu0
      %v1901 = vadd.f32 %v1436, %v1900
      %v1902 = vpop.f32.mrf.mxu0
      %v1903 = vadd.f32 %v1438, %v1902
      %1904 = vdwg.mxu0
      %v1905 = vmax.f32 %v1737, %v1826
      %1906 = vmax.xlane.f32.xlu0 %v1905
      %v1907 = vpop.xlane.xlu0 %1906
      %v1908 = vmax.f32 %v1739, %v1828
      %1909 = vmax.xlane.f32.xlu0 %v1908
      %v1910 = vpop.xlane.xlu0 %1909
      %v1911 = vmax.f32 %v1742, %v1831
      %1912 = vmax.xlane.f32.xlu0 %v1911
      %v1913 = vpop.xlane.xlu0 %1912
      %v1914 = vmax.f32 %v1744, %v1833
      %1915 = vmax.xlane.f32.xlu0 %v1914
      %v1916 = vpop.xlane.xlu0 %1915
      %v1917 = vmax.f32 %v1747, %v1836
      %1918 = vmax.xlane.f32.xlu0 %v1917
      %v1919 = vpop.xlane.xlu0 %1918
      %v1920 = vmax.f32 %v1749, %v1838
      %1921 = vmax.xlane.f32.xlu0 %v1920
      %v1922 = vpop.xlane.xlu0 %1921
      %v1923 = vmax.f32 %v1752, %v1841
      %1924 = vmax.xlane.f32.xlu0 %v1923
      %v1925 = vpop.xlane.xlu0 %1924
      %v1926 = vmax.f32 %v1754, %v1843
      %1927 = vmax.xlane.f32.xlu0 %v1926
      %v1928 = vpop.xlane.xlu0 %1927
      %v1929 = vmax.f32 %v1757, %v1846
      %1930 = vmax.xlane.f32.xlu0 %v1929
      %v1931 = vpop.xlane.xlu0 %1930
      %v1932 = vmax.f32 %v1759, %v1848
      %1933 = vmax.xlane.f32.xlu0 %v1932
      %v1934 = vpop.xlane.xlu0 %1933
      %v1935 = vmax.f32 %v1762, %v1851
      %1936 = vmax.xlane.f32.xlu0 %v1935
      %v1937 = vpop.xlane.xlu0 %1936
      %v1938 = vmax.f32 %v1764, %v1853
      %1939 = vmax.xlane.f32.xlu0 %v1938
      %v1940 = vpop.xlane.xlu0 %1939
      %v1941 = vmax.f32 %v1767, %v1856
      %1942 = vmax.xlane.f32.xlu0 %v1941
      %v1943 = vpop.xlane.xlu0 %1942
      %v1944 = vmax.f32 %v1769, %v1858
      %1945 = vmax.xlane.f32.xlu0 %v1944
      %v1946 = vpop.xlane.xlu0 %1945
      %v1947 = vmax.f32 %v1772, %v1861
      %1948 = vmax.xlane.f32.xlu0 %v1947
      %v1949 = vpop.xlane.xlu0 %1948
      %v1950 = vmax.f32 %v1774, %v1863
      %1951 = vmax.xlane.f32.xlu0 %v1950
      %v1952 = vpop.xlane.xlu0 %1951
      %v1953 = vmax.f32 %v1777, %v1866
      %1954 = vmax.xlane.f32.xlu0 %v1953
      %v1955 = vpop.xlane.xlu0 %1954
      %v1956 = vmax.f32 %v1779, %v1868
      %1957 = vmax.xlane.f32.xlu0 %v1956
      %v1958 = vpop.xlane.xlu0 %1957
      %v1959 = vmax.f32 %v1782, %v1871
      %1960 = vmax.xlane.f32.xlu0 %v1959
      %v1961 = vpop.xlane.xlu0 %1960
      %v1962 = vmax.f32 %v1784, %v1873
      %1963 = vmax.xlane.f32.xlu0 %v1962
      %v1964 = vpop.xlane.xlu0 %1963
      %v1965 = vmax.f32 %v1787, %v1876
      %1966 = vmax.xlane.f32.xlu0 %v1965
      %v1967 = vpop.xlane.xlu0 %1966
      %v1968 = vmax.f32 %v1789, %v1878
      %1969 = vmax.xlane.f32.xlu0 %v1968
      %v1970 = vpop.xlane.xlu0 %1969
      %v1971 = vmax.f32 %v1792, %v1881
      %1972 = vmax.xlane.f32.xlu0 %v1971
      %v1973 = vpop.xlane.xlu0 %1972
      %v1974 = vmax.f32 %v1794, %v1883
      %1975 = vmax.xlane.f32.xlu0 %v1974
      %v1976 = vpop.xlane.xlu0 %1975
      %v1977 = vmax.f32 %v1797, %v1886
      %1978 = vmax.xlane.f32.xlu0 %v1977
      %v1979 = vpop.xlane.xlu0 %1978
      %v1980 = vmax.f32 %v1799, %v1888
      %1981 = vmax.xlane.f32.xlu0 %v1980
      %v1982 = vpop.xlane.xlu0 %1981
      %v1983 = vmax.f32 %v1802, %v1891
      %1984 = vmax.xlane.f32.xlu0 %v1983
      %v1985 = vpop.xlane.xlu0 %1984
      %v1986 = vmax.f32 %v1804, %v1893
      %1987 = vmax.xlane.f32.xlu0 %v1986
      %v1988 = vpop.xlane.xlu0 %1987
      %v1989 = vmax.f32 %v1807, %v1896
      %1990 = vmax.xlane.f32.xlu0 %v1989
      %v1991 = vpop.xlane.xlu0 %1990
      %v1992 = vmax.f32 %v1809, %v1898
      %1993 = vmax.xlane.f32.xlu0 %v1992
      %v1994 = vpop.xlane.xlu0 %1993
      %v1995 = vmax.f32 %v1812, %v1901
      %1996 = vmax.xlane.f32.xlu0 %v1995
      %v1997 = vpop.xlane.xlu0 %1996
      %v1998 = vmax.f32 %v1814, %v1903
      %1999 = vmax.xlane.f32.xlu0 %v1998
      %v2000 = vpop.xlane.xlu0 %1999
      %v2001 = vsub.f32 %v1737, %v1907
      %v2002 = vsub.f32 %v1826, %v1907
      %v2003 = vsub.f32 %v1739, %v1910
      %v2004 = vsub.f32 %v1828, %v1910
      %v2005 = vsub.f32 %v1742, %v1913
      %v2006 = vsub.f32 %v1831, %v1913
      %v2007 = vsub.f32 %v1744, %v1916
      %v2008 = vsub.f32 %v1833, %v1916
      %v2009 = vsub.f32 %v1747, %v1919
      %v2010 = vsub.f32 %v1836, %v1919
      %v2011 = vsub.f32 %v1749, %v1922
      %v2012 = vsub.f32 %v1838, %v1922
      %v2013 = vsub.f32 %v1752, %v1925
      %v2014 = vsub.f32 %v1841, %v1925
      %v2015 = vsub.f32 %v1754, %v1928
      %v2016 = vsub.f32 %v1843, %v1928
      %v2017 = vsub.f32 %v1757, %v1931
      %v2018 = vsub.f32 %v1846, %v1931
      %v2019 = vsub.f32 %v1759, %v1934
      %v2020 = vsub.f32 %v1848, %v1934
      %v2021 = vsub.f32 %v1762, %v1937
      %v2022 = vsub.f32 %v1851, %v1937
      %v2023 = vsub.f32 %v1764, %v1940
      %v2024 = vsub.f32 %v1853, %v1940
      %v2025 = vsub.f32 %v1767, %v1943
      %v2026 = vsub.f32 %v1856, %v1943
      %v2027 = vsub.f32 %v1769, %v1946
      %v2028 = vsub.f32 %v1858, %v1946
      %v2029 = vsub.f32 %v1772, %v1949
      %v2030 = vsub.f32 %v1861, %v1949
      %v2031 = vsub.f32 %v1774, %v1952
      %v2032 = vsub.f32 %v1863, %v1952
      %v2033 = vsub.f32 %v1777, %v1955
      %v2034 = vsub.f32 %v1866, %v1955
      %v2035 = vsub.f32 %v1779, %v1958
      %v2036 = vsub.f32 %v1868, %v1958
      %v2037 = vsub.f32 %v1782, %v1961
      %v2038 = vsub.f32 %v1871, %v1961
      %v2039 = vsub.f32 %v1784, %v1964
      %v2040 = vsub.f32 %v1873, %v1964
      %v2041 = vsub.f32 %v1787, %v1967
      %v2042 = vsub.f32 %v1876, %v1967
      %v2043 = vsub.f32 %v1789, %v1970
      %v2044 = vsub.f32 %v1878, %v1970
      %v2045 = vsub.f32 %v1792, %v1973
      %v2046 = vsub.f32 %v1881, %v1973
      %v2047 = vsub.f32 %v1794, %v1976
      %v2048 = vsub.f32 %v1883, %v1976
      %v2049 = vsub.f32 %v1797, %v1979
      %v2050 = vsub.f32 %v1886, %v1979
      %v2051 = vsub.f32 %v1799, %v1982
      %v2052 = vsub.f32 %v1888, %v1982
      %v2053 = vsub.f32 %v1802, %v1985
      %v2054 = vsub.f32 %v1891, %v1985
      %v2055 = vsub.f32 %v1804, %v1988
      %v2056 = vsub.f32 %v1893, %v1988
      %v2057 = vsub.f32 %v1807, %v1991
      %v2058 = vsub.f32 %v1896, %v1991
      %v2059 = vsub.f32 %v1809, %v1994
      %v2060 = vsub.f32 %v1898, %v1994
      %v2061 = vsub.f32 %v1812, %v1997
      %v2062 = vsub.f32 %v1901, %v1997
      %v2063 = vsub.f32 %v1814, %v2000
      %v2064 = vsub.f32 %v1903, %v2000
      %v2065 = vmul.f32 %v2001, 1.442695
      %v2066 = vpow.pop %v2065
      %v2067 = vmul.f32 %v2002, 1.442695
      %v2068 = vpow.pop %v2067
      %v2069 = vmul.f32 %v2003, 1.442695
      %v2070 = vpow.pop %v2069
      %v2071 = vmul.f32 %v2004, 1.442695
      %v2072 = vpow.pop %v2071
      %v2073 = vmul.f32 %v2005, 1.442695
      %v2074 = vpow.pop %v2073
      %v2075 = vmul.f32 %v2006, 1.442695
      %v2076 = vpow.pop %v2075
      %v2077 = vmul.f32 %v2007, 1.442695
      %v2078 = vpow.pop %v2077
      %v2079 = vmul.f32 %v2008, 1.442695
      %v2080 = vpow.pop %v2079
      %v2081 = vmul.f32 %v2009, 1.442695
      %v2082 = vpow.pop %v2081
      %v2083 = vmul.f32 %v2010, 1.442695
      %v2084 = vpow.pop %v2083
      %v2085 = vmul.f32 %v2011, 1.442695
      %v2086 = vpow.pop %v2085
      %v2087 = vmul.f32 %v2012, 1.442695
      %v2088 = vpow.pop %v2087
      %v2089 = vmul.f32 %v2013, 1.442695
      %v2090 = vpow.pop %v2089
      %v2091 = vmul.f32 %v2014, 1.442695
      %v2092 = vpow.pop %v2091
      %v2093 = vmul.f32 %v2015, 1.442695
      %v2094 = vpow.pop %v2093
      %v2095 = vmul.f32 %v2016, 1.442695
      %v2096 = vpow.pop %v2095
      %v2097 = vmul.f32 %v2017, 1.442695
      %v2098 = vpow.pop %v2097
      %v2099 = vmul.f32 %v2018, 1.442695
      %v2100 = vpow.pop %v2099
      %v2101 = vmul.f32 %v2019, 1.442695
      %v2102 = vpow.pop %v2101
      %v2103 = vmul.f32 %v2020, 1.442695
      %v2104 = vpow.pop %v2103
      %v2105 = vmul.f32 %v2021, 1.442695
      %v2106 = vpow.pop %v2105
      %v2107 = vmul.f32 %v2022, 1.442695
      %v2108 = vpow.pop %v2107
      %v2109 = vmul.f32 %v2023, 1.442695
      %v2110 = vpow.pop %v2109
      %v2111 = vmul.f32 %v2024, 1.442695
      %v2112 = vpow.pop %v2111
      %v2113 = vmul.f32 %v2025, 1.442695
      %v2114 = vpow.pop %v2113
      %v2115 = vmul.f32 %v2026, 1.442695
      %v2116 = vpow.pop %v2115
      %v2117 = vmul.f32 %v2027, 1.442695
      %v2118 = vpow.pop %v2117
      %v2119 = vmul.f32 %v2028, 1.442695
      %v2120 = vpow.pop %v2119
      %v2121 = vmul.f32 %v2029, 1.442695
      %v2122 = vpow.pop %v2121
      %v2123 = vmul.f32 %v2030, 1.442695
      %v2124 = vpow.pop %v2123
      %v2125 = vmul.f32 %v2031, 1.442695
      %v2126 = vpow.pop %v2125
      %v2127 = vmul.f32 %v2032, 1.442695
      %v2128 = vpow.pop %v2127
      %v2129 = vmul.f32 %v2033, 1.442695
      %v2130 = vpow.pop %v2129
      %v2131 = vmul.f32 %v2034, 1.442695
      %v2132 = vpow.pop %v2131
      %v2133 = vmul.f32 %v2035, 1.442695
      %v2134 = vpow.pop %v2133
      %v2135 = vmul.f32 %v2036, 1.442695
      %v2136 = vpow.pop %v2135
      %v2137 = vmul.f32 %v2037, 1.442695
      %v2138 = vpow.pop %v2137
      %v2139 = vmul.f32 %v2038, 1.442695
      %v2140 = vpow.pop %v2139
      %v2141 = vmul.f32 %v2039, 1.442695
      %v2142 = vpow.pop %v2141
      %v2143 = vmul.f32 %v2040, 1.442695
      %v2144 = vpow.pop %v2143
      %v2145 = vmul.f32 %v2041, 1.442695
      %v2146 = vpow.pop %v2145
      %v2147 = vmul.f32 %v2042, 1.442695
      %v2148 = vpow.pop %v2147
      %v2149 = vmul.f32 %v2043, 1.442695
      %v2150 = vpow.pop %v2149
      %v2151 = vmul.f32 %v2044, 1.442695
      %v2152 = vpow.pop %v2151
      %v2153 = vmul.f32 %v2045, 1.442695
      %v2154 = vpow.pop %v2153
      %v2155 = vmul.f32 %v2046, 1.442695
      %v2156 = vpow.pop %v2155
      %v2157 = vmul.f32 %v2047, 1.442695
      %v2158 = vpow.pop %v2157
      %v2159 = vmul.f32 %v2048, 1.442695
      %v2160 = vpow.pop %v2159
      %v2161 = vmul.f32 %v2049, 1.442695
      %v2162 = vpow.pop %v2161
      %v2163 = vmul.f32 %v2050, 1.442695
      %v2164 = vpow.pop %v2163
      %v2165 = vmul.f32 %v2051, 1.442695
      %v2166 = vpow.pop %v2165
      %v2167 = vmul.f32 %v2052, 1.442695
      %v2168 = vpow.pop %v2167
      %v2169 = vmul.f32 %v2053, 1.442695
      %v2170 = vpow.pop %v2169
      %v2171 = vmul.f32 %v2054, 1.442695
      %v2172 = vpow.pop %v2171
      %v2173 = vmul.f32 %v2055, 1.442695
      %v2174 = vpow.pop %v2173
      %v2175 = vmul.f32 %v2056, 1.442695
      %v2176 = vpow.pop %v2175
      %v2177 = vmul.f32 %v2057, 1.442695
      %v2178 = vpow.pop %v2177
      %v2179 = vmul.f32 %v2058, 1.442695
      %v2180 = vpow.pop %v2179
      %v2181 = vmul.f32 %v2059, 1.442695
      %v2182 = vpow.pop %v2181
      %v2183 = vmul.f32 %v2060, 1.442695
      %v2184 = vpow.pop %v2183
      %v2185 = vmul.f32 %v2061, 1.442695
      %v2186 = vpow.pop %v2185
      %v2187 = vmul.f32 %v2062, 1.442695
      %v2188 = vpow.pop %v2187
      %v2189 = vmul.f32 %v2063, 1.442695
      %v2190 = vpow.pop %v2189
      %v2191 = vmul.f32 %v2064, 1.442695
      %v2192 = vpow.pop %v2191
      %v2193 = vadd.f32 %v2066, %v2068
      %2194 = vadd.xlane.f32.xlu0 %v2193
      %v2195 = vpop.xlane.xlu0 %2194
      %v2196 = vadd.f32 %v2070, %v2072
      %2197 = vadd.xlane.f32.xlu0 %v2196
      %v2198 = vpop.xlane.xlu0 %2197
      %v2199 = vadd.f32 %v2074, %v2076
      %2200 = vadd.xlane.f32.xlu0 %v2199
      %v2201 = vpop.xlane.xlu0 %2200
      %v2202 = vadd.f32 %v2078, %v2080
      %2203 = vadd.xlane.f32.xlu0 %v2202
      %v2204 = vpop.xlane.xlu0 %2203
      %v2205 = vadd.f32 %v2082, %v2084
      %2206 = vadd.xlane.f32.xlu0 %v2205
      %v2207 = vpop.xlane.xlu0 %2206
      %v2208 = vadd.f32 %v2086, %v2088
      %2209 = vadd.xlane.f32.xlu0 %v2208
      %v2210 = vpop.xlane.xlu0 %2209
      %v2211 = vadd.f32 %v2090, %v2092
      %2212 = vadd.xlane.f32.xlu0 %v2211
      %v2213 = vpop.xlane.xlu0 %2212
      %v2214 = vadd.f32 %v2094, %v2096
      %2215 = vadd.xlane.f32.xlu0 %v2214
      %v2216 = vpop.xlane.xlu0 %2215
      %v2217 = vadd.f32 %v2098, %v2100
      %2218 = vadd.xlane.f32.xlu0 %v2217
      %v2219 = vpop.xlane.xlu0 %2218
      %v2220 = vadd.f32 %v2102, %v2104
      %2221 = vadd.xlane.f32.xlu0 %v2220
      %v2222 = vpop.xlane.xlu0 %2221
      %v2223 = vadd.f32 %v2106, %v2108
      %2224 = vadd.xlane.f32.xlu0 %v2223
      %v2225 = vpop.xlane.xlu0 %2224
      %v2226 = vadd.f32 %v2110, %v2112
      %2227 = vadd.xlane.f32.xlu0 %v2226
      %v2228 = vpop.xlane.xlu0 %2227
      %v2229 = vadd.f32 %v2114, %v2116
      %2230 = vadd.xlane.f32.xlu0 %v2229
      %v2231 = vpop.xlane.xlu0 %2230
      %v2232 = vadd.f32 %v2118, %v2120
      %2233 = vadd.xlane.f32.xlu0 %v2232
      %v2234 = vpop.xlane.xlu0 %2233
      %v2235 = vadd.f32 %v2122, %v2124
      %2236 = vadd.xlane.f32.xlu0 %v2235
      %v2237 = vpop.xlane.xlu0 %2236
      %v2238 = vadd.f32 %v2126, %v2128
      %2239 = vadd.xlane.f32.xlu0 %v2238
      %v2240 = vpop.xlane.xlu0 %2239
      %v2241 = vadd.f32 %v2130, %v2132
      %2242 = vadd.xlane.f32.xlu0 %v2241
      %v2243 = vpop.xlane.xlu0 %2242
      %v2244 = vadd.f32 %v2134, %v2136
      %2245 = vadd.xlane.f32.xlu0 %v2244
      %v2246 = vpop.xlane.xlu0 %2245
      %v2247 = vadd.f32 %v2138, %v2140
      %2248 = vadd.xlane.f32.xlu0 %v2247
      %v2249 = vpop.xlane.xlu0 %2248
      %v2250 = vadd.f32 %v2142, %v2144
      %2251 = vadd.xlane.f32.xlu0 %v2250
      %v2252 = vpop.xlane.xlu0 %2251
      %v2253 = vadd.f32 %v2146, %v2148
      %2254 = vadd.xlane.f32.xlu0 %v2253
      %v2255 = vpop.xlane.xlu0 %2254
      %v2256 = vadd.f32 %v2150, %v2152
      %2257 = vadd.xlane.f32.xlu0 %v2256
      %v2258 = vpop.xlane.xlu0 %2257
      %v2259 = vadd.f32 %v2154, %v2156
      %2260 = vadd.xlane.f32.xlu0 %v2259
      %v2261 = vpop.xlane.xlu0 %2260
      %v2262 = vadd.f32 %v2158, %v2160
      %2263 = vadd.xlane.f32.xlu0 %v2262
      %v2264 = vpop.xlane.xlu0 %2263
      %v2265 = vadd.f32 %v2162, %v2164
      %2266 = vadd.xlane.f32.xlu0 %v2265
      %v2267 = vpop.xlane.xlu0 %2266
      %v2268 = vadd.f32 %v2166, %v2168
      %2269 = vadd.xlane.f32.xlu0 %v2268
      %v2270 = vpop.xlane.xlu0 %2269
      %v2271 = vadd.f32 %v2170, %v2172
      %2272 = vadd.xlane.f32.xlu0 %v2271
      %v2273 = vpop.xlane.xlu0 %2272
      %v2274 = vadd.f32 %v2174, %v2176
      %2275 = vadd.xlane.f32.xlu0 %v2274
      %v2276 = vpop.xlane.xlu0 %2275
      %v2277 = vadd.f32 %v2178, %v2180
      %2278 = vadd.xlane.f32.xlu0 %v2277
      %v2279 = vpop.xlane.xlu0 %2278
      %v2280 = vadd.f32 %v2182, %v2184
      %2281 = vadd.xlane.f32.xlu0 %v2280
      %v2282 = vpop.xlane.xlu0 %2281
      %v2283 = vadd.f32 %v2186, %v2188
      %2284 = vadd.xlane.f32.xlu0 %v2283
      %v2285 = vpop.xlane.xlu0 %2284
      %v2286 = vadd.f32 %v2190, %v2192
      %2287 = vadd.xlane.f32.xlu0 %v2286
      %v2288 = vpop.xlane.xlu0 %2287
      %v2289 = vrcp.pop %v2195
      %v2290 = vrcp.pop %v2198
      %v2291 = vrcp.pop %v2201
      %v2292 = vrcp.pop %v2204
      %v2293 = vrcp.pop %v2207
      %v2294 = vrcp.pop %v2210
      %v2295 = vrcp.pop %v2213
      %v2296 = vrcp.pop %v2216
      %v2297 = vrcp.pop %v2219
      %v2298 = vrcp.pop %v2222
      %v2299 = vrcp.pop %v2225
      %v2300 = vrcp.pop %v2228
      %v2301 = vrcp.pop %v2231
      %v2302 = vrcp.pop %v2234
      %v2303 = vrcp.pop %v2237
      %v2304 = vrcp.pop %v2240
      %v2305 = vrcp.pop %v2243
      %v2306 = vrcp.pop %v2246
      %v2307 = vrcp.pop %v2249
      %v2308 = vrcp.pop %v2252
      %v2309 = vrcp.pop %v2255
      %v2310 = vrcp.pop %v2258
      %v2311 = vrcp.pop %v2261
      %v2312 = vrcp.pop %v2264
      %v2313 = vrcp.pop %v2267
      %v2314 = vrcp.pop %v2270
      %v2315 = vrcp.pop %v2273
      %v2316 = vrcp.pop %v2276
      %v2317 = vrcp.pop %v2279
      %v2318 = vrcp.pop %v2282
      %v2319 = vrcp.pop %v2285
      %v2320 = vrcp.pop %v2288
      %v2321 = vmul.f32 %v2066, %v2289
      %v2322 = vmul.f32 %v2068, %v2289
      %v2323 = vmul.f32 %v2070, %v2290
      %v2324 = vmul.f32 %v2072, %v2290
      %v2325 = vmul.f32 %v2074, %v2291
      %v2326 = vmul.f32 %v2076, %v2291
      %v2327 = vmul.f32 %v2078, %v2292
      %v2328 = vmul.f32 %v2080, %v2292
      %v2329 = vmul.f32 %v2082, %v2293
      %v2330 = vmul.f32 %v2084, %v2293
      %v2331 = vmul.f32 %v2086, %v2294
      %v2332 = vmul.f32 %v2088, %v2294
      %v2333 = vmul.f32 %v2090, %v2295
      %v2334 = vmul.f32 %v2092, %v2295
      %v2335 = vmul.f32 %v2094, %v2296
      %v2336 = vmul.f32 %v2096, %v2296
      %v2337 = vmul.f32 %v2098, %v2297
      %v2338 = vmul.f32 %v2100, %v2297
      %v2339 = vmul.f32 %v2102, %v2298
      %v2340 = vmul.f32 %v2104, %v2298
      %v2341 = vmul.f32 %v2106, %v2299
      %v2342 = vmul.f32 %v2108, %v2299
      %v2343 = vmul.f32 %v2110, %v2300
      %v2344 = vmul.f32 %v2112, %v2300
      %v2345 = vmul.f32 %v2114, %v2301
      %v2346 = vmul.f32 %v2116, %v2301
      %v2347 = vmul.f32 %v2118, %v2302
      %v2348 = vmul.f32 %v2120, %v2302
      %v2349 = vmul.f32 %v2122, %v2303
      %v2350 = vmul.f32 %v2124, %v2303
      %v2351 = vmul.f32 %v2126, %v2304
      %v2352 = vmul.f32 %v2128, %v2304
      %v2353 = vmul.f32 %v2130, %v2305
      %v2354 = vmul.f32 %v2132, %v2305
      %v2355 = vmul.f32 %v2134, %v2306
      %v2356 = vmul.f32 %v2136, %v2306
      %v2357 = vmul.f32 %v2138, %v2307
      %v2358 = vmul.f32 %v2140, %v2307
      %v2359 = vmul.f32 %v2142, %v2308
      %v2360 = vmul.f32 %v2144, %v2308
      %v2361 = vmul.f32 %v2146, %v2309
      %v2362 = vmul.f32 %v2148, %v2309
      %v2363 = vmul.f32 %v2150, %v2310
      %v2364 = vmul.f32 %v2152, %v2310
      %v2365 = vmul.f32 %v2154, %v2311
      %v2366 = vmul.f32 %v2156, %v2311
      %v2367 = vmul.f32 %v2158, %v2312
      %v2368 = vmul.f32 %v2160, %v2312
      %v2369 = vmul.f32 %v2162, %v2313
      %v2370 = vmul.f32 %v2164, %v2313
      %v2371 = vmul.f32 %v2166, %v2314
      %v2372 = vmul.f32 %v2168, %v2314
      %v2373 = vmul.f32 %v2170, %v2315
      %v2374 = vmul.f32 %v2172, %v2315
      %v2375 = vmul.f32 %v2174, %v2316
      %v2376 = vmul.f32 %v2176, %v2316
      %v2377 = vmul.f32 %v2178, %v2317
      %v2378 = vmul.f32 %v2180, %v2317
      %v2379 = vmul.f32 %v2182, %v2318
      %v2380 = vmul.f32 %v2184, %v2318
      %v2381 = vmul.f32 %v2186, %v2319
      %v2382 = vmul.f32 %v2188, %v2319
      %v2383 = vmul.f32 %v2190, %v2320
      %v2384 = vmul.f32 %v2192, %v2320
      %v2385 = vpack.c.bf16 %v2322, %v2321
      %v2386 = vpack.c.bf16 %v2324, %v2323
      %v2387 = vpack.c.bf16 %v2326, %v2325
      %v2388 = vpack.c.bf16 %v2328, %v2327
      %v2389 = vpack.c.bf16 %v2330, %v2329
      %v2390 = vpack.c.bf16 %v2332, %v2331
      %v2391 = vpack.c.bf16 %v2334, %v2333
      %v2392 = vpack.c.bf16 %v2336, %v2335
      %v2393 = vpack.c.bf16 %v2338, %v2337
      %v2394 = vpack.c.bf16 %v2340, %v2339
      %v2395 = vpack.c.bf16 %v2342, %v2341
      %v2396 = vpack.c.bf16 %v2344, %v2343
      %v2397 = vpack.c.bf16 %v2346, %v2345
      %v2398 = vpack.c.bf16 %v2348, %v2347
      %v2399 = vpack.c.bf16 %v2350, %v2349
      %v2400 = vpack.c.bf16 %v2352, %v2351
      %v2401 = vpack.c.bf16 %v2354, %v2353
      %v2402 = vpack.c.bf16 %v2356, %v2355
      %v2403 = vpack.c.bf16 %v2358, %v2357
      %v2404 = vpack.c.bf16 %v2360, %v2359
      %v2405 = vpack.c.bf16 %v2362, %v2361
      %v2406 = vpack.c.bf16 %v2364, %v2363
      %v2407 = vpack.c.bf16 %v2366, %v2365
      %v2408 = vpack.c.bf16 %v2368, %v2367
      %v2409 = vpack.c.bf16 %v2370, %v2369
      %v2410 = vpack.c.bf16 %v2372, %v2371
      %v2411 = vpack.c.bf16 %v2374, %v2373
      %v2412 = vpack.c.bf16 %v2376, %v2375
      %v2413 = vpack.c.bf16 %v2378, %v2377
      %v2414 = vpack.c.bf16 %v2380, %v2379
      %v2415 = vpack.c.bf16 %v2382, %v2381
      %v2416 = vpack.c.bf16 %v2384, %v2383
      %v2449 = vunpack.c.l.b16 %v2385
      %v2450 = vunpack.c.h.b16 %v2385
      %v2451 = vunpack.c.l.b16 %v2386
      %v2452 = vunpack.c.h.b16 %v2386
      %v2453 = vunpack.c.l.b16 %v2387
      %v2454 = vunpack.c.h.b16 %v2387
      %v2455 = vunpack.c.l.b16 %v2388
      %v2456 = vunpack.c.h.b16 %v2388
      %v2457 = vunpack.c.l.b16 %v2389
      %v2458 = vunpack.c.h.b16 %v2389
      %v2459 = vunpack.c.l.b16 %v2390
      %v2460 = vunpack.c.h.b16 %v2390
      %v2461 = vunpack.c.l.b16 %v2391
      %v2462 = vunpack.c.h.b16 %v2391
      %v2463 = vunpack.c.l.b16 %v2392
      %v2464 = vunpack.c.h.b16 %v2392
      %v2465 = vunpack.c.l.b16 %v2393
      %v2466 = vunpack.c.h.b16 %v2393
      %v2467 = vunpack.c.l.b16 %v2394
      %v2468 = vunpack.c.h.b16 %v2394
      %v2469 = vunpack.c.l.b16 %v2395
      %v2470 = vunpack.c.h.b16 %v2395
      %v2471 = vunpack.c.l.b16 %v2396
      %v2472 = vunpack.c.h.b16 %v2396
      %v2473 = vunpack.c.l.b16 %v2397
      %v2474 = vunpack.c.h.b16 %v2397
      %v2475 = vunpack.c.l.b16 %v2398
      %v2476 = vunpack.c.h.b16 %v2398
      %v2477 = vunpack.c.l.b16 %v2399
      %v2478 = vunpack.c.h.b16 %v2399
      %v2479 = vunpack.c.l.b16 %v2400
      %v2480 = vunpack.c.h.b16 %v2400
      %v2481 = vunpack.c.l.b16 %v2401
      %v2482 = vunpack.c.h.b16 %v2401
      %v2483 = vunpack.c.l.b16 %v2402
      %v2484 = vunpack.c.h.b16 %v2402
      %v2485 = vunpack.c.l.b16 %v2403
      %v2486 = vunpack.c.h.b16 %v2403
      %v2487 = vunpack.c.l.b16 %v2404
      %v2488 = vunpack.c.h.b16 %v2404
      %v2489 = vunpack.c.l.b16 %v2405
      %v2490 = vunpack.c.h.b16 %v2405
      %v2491 = vunpack.c.l.b16 %v2406
      %v2492 = vunpack.c.h.b16 %v2406
      %v2493 = vunpack.c.l.b16 %v2407
      %v2494 = vunpack.c.h.b16 %v2407
      %v2495 = vunpack.c.l.b16 %v2408
      %v2496 = vunpack.c.h.b16 %v2408
      %v2497 = vunpack.c.l.b16 %v2409
      %v2498 = vunpack.c.h.b16 %v2409
      %v2499 = vunpack.c.l.b16 %v2410
      %v2500 = vunpack.c.h.b16 %v2410
      %v2501 = vunpack.c.l.b16 %v2411
      %v2502 = vunpack.c.h.b16 %v2411
      %v2503 = vunpack.c.l.b16 %v2412
      %v2504 = vunpack.c.h.b16 %v2412
      %v2505 = vunpack.c.l.b16 %v2413
      %v2506 = vunpack.c.h.b16 %v2413
      %v2507 = vunpack.c.l.b16 %v2414
      %v2508 = vunpack.c.h.b16 %v2414
      %v2509 = vunpack.c.l.b16 %v2415
      %v2510 = vunpack.c.h.b16 %v2415
      %v2511 = vunpack.c.l.b16 %v2416
      %v2512 = vunpack.c.h.b16 %v2416
      %v2513 = vpack.c.b16 %v2451, %v2449
      %v2514 = vpack.c.b16 %v2452, %v2450
      %v2515 = vpack.c.b16 %v2455, %v2453
      %v2516 = vpack.c.b16 %v2456, %v2454
      %v2517 = vpack.c.b16 %v2459, %v2457
      %v2518 = vpack.c.b16 %v2460, %v2458
      %v2519 = vpack.c.b16 %v2463, %v2461
      %v2520 = vpack.c.b16 %v2464, %v2462
      %v2521 = vpack.c.b16 %v2467, %v2465
      %v2522 = vpack.c.b16 %v2468, %v2466
      %v2523 = vpack.c.b16 %v2471, %v2469
      %v2524 = vpack.c.b16 %v2472, %v2470
      %v2525 = vpack.c.b16 %v2475, %v2473
      %v2526 = vpack.c.b16 %v2476, %v2474
      %v2527 = vpack.c.b16 %v2479, %v2477
      %v2528 = vpack.c.b16 %v2480, %v2478
      %v2529 = vpack.c.b16 %v2483, %v2481
      %v2530 = vpack.c.b16 %v2484, %v2482
      %v2531 = vpack.c.b16 %v2487, %v2485
      %v2532 = vpack.c.b16 %v2488, %v2486
      %v2533 = vpack.c.b16 %v2491, %v2489
      %v2534 = vpack.c.b16 %v2492, %v2490
      %v2535 = vpack.c.b16 %v2495, %v2493
      %v2536 = vpack.c.b16 %v2496, %v2494
      %v2537 = vpack.c.b16 %v2499, %v2497
      %v2538 = vpack.c.b16 %v2500, %v2498
      %v2539 = vpack.c.b16 %v2503, %v2501
      %v2540 = vpack.c.b16 %v2504, %v2502
      %v2541 = vpack.c.b16 %v2507, %v2505
      %v2542 = vpack.c.b16 %v2508, %v2506
      %v2543 = vpack.c.b16 %v2511, %v2509
      %v2544 = vpack.c.b16 %v2512, %v2510
      %v2609 = vunpack.c.l.b16 %v1343
      %v2610 = vunpack.c.l.b16 %v1344
      %v2611 = vunpack.c.l.b16 %v1345
      %v2612 = vunpack.c.l.b16 %v1346
      %v2613 = vunpack.c.l.b16 %v1347
      %v2614 = vunpack.c.l.b16 %v1348
      %v2615 = vunpack.c.l.b16 %v1349
      %v2616 = vunpack.c.l.b16 %v1350
      %v2617 = vunpack.c.l.b16 %v1351
      %v2618 = vunpack.c.l.b16 %v1352
      %v2619 = vunpack.c.l.b16 %v1353
      %v2620 = vunpack.c.l.b16 %v1354
      %v2621 = vunpack.c.l.b16 %v1355
      %v2622 = vunpack.c.l.b16 %v1356
      %v2623 = vunpack.c.l.b16 %v1357
      %v2624 = vunpack.c.l.b16 %v1358
      %v2625 = vunpack.c.l.b16 %v1359
      %v2626 = vunpack.c.l.b16 %v1360
      %v2627 = vunpack.c.l.b16 %v1361
      %v2628 = vunpack.c.l.b16 %v1362
      %v2629 = vunpack.c.l.b16 %v1363
      %v2630 = vunpack.c.l.b16 %v1364
      %v2631 = vunpack.c.l.b16 %v1365
      %v2632 = vunpack.c.l.b16 %v1366
      %v2633 = vunpack.c.l.b16 %v1367
      %v2634 = vunpack.c.l.b16 %v1368
      %v2635 = vunpack.c.l.b16 %v1369
      %v2636 = vunpack.c.l.b16 %v1370
      %v2637 = vunpack.c.l.b16 %v1371
      %v2638 = vunpack.c.l.b16 %v1372
      %v2639 = vunpack.c.l.b16 %v1373
      %v2640 = vunpack.c.l.b16 %v1374
      %v2641 = vpack.c.b16 %v2610, %v2609
      %v2642 = vpack.c.b16 %v2612, %v2611
      %v2643 = vpack.c.b16 %v2614, %v2613
      %v2644 = vpack.c.b16 %v2616, %v2615
      %v2645 = vpack.c.b16 %v2618, %v2617
      %v2646 = vpack.c.b16 %v2620, %v2619
      %v2647 = vpack.c.b16 %v2622, %v2621
      %v2648 = vpack.c.b16 %v2624, %v2623
      %v2649 = vpack.c.b16 %v2626, %v2625
      %v2650 = vpack.c.b16 %v2628, %v2627
      %v2651 = vpack.c.b16 %v2630, %v2629
      %v2652 = vpack.c.b16 %v2632, %v2631
      %v2653 = vpack.c.b16 %v2634, %v2633
      %v2654 = vpack.c.b16 %v2636, %v2635
      %v2655 = vpack.c.b16 %v2638, %v2637
      %v2656 = vpack.c.b16 %v2640, %v2639
      %2657 = vrot.lane.b32.xlu0 %v2641, 64
      %v2658 = vpop.permute.xlu0 %2657
      %2659 = vrot.lane.b32.xlu0 %v2642, 64
      %v2660 = vpop.permute.xlu0 %2659
      %2661 = vrot.lane.b32.xlu0 %v2643, 64
      %v2662 = vpop.permute.xlu0 %2661
      %2663 = vrot.lane.b32.xlu0 %v2644, 64
      %v2664 = vpop.permute.xlu0 %2663
      %2665 = vrot.lane.b32.xlu0 %v2645, 64
      %v2666 = vpop.permute.xlu0 %2665
      %2667 = vrot.lane.b32.xlu0 %v2646, 64
      %v2668 = vpop.permute.xlu0 %2667
      %2669 = vrot.lane.b32.xlu0 %v2647, 64
      %v2670 = vpop.permute.xlu0 %2669
      %2671 = vrot.lane.b32.xlu0 %v2648, 64
      %v2672 = vpop.permute.xlu0 %2671
      %2673 = vrot.lane.b32.xlu0 %v2649, 64
      %v2674 = vpop.permute.xlu0 %2673
      %2675 = vrot.lane.b32.xlu0 %v2650, 64
      %v2676 = vpop.permute.xlu0 %2675
      %2677 = vrot.lane.b32.xlu0 %v2651, 64
      %v2678 = vpop.permute.xlu0 %2677
      %2679 = vrot.lane.b32.xlu0 %v2652, 64
      %v2680 = vpop.permute.xlu0 %2679
      %2681 = vrot.lane.b32.xlu0 %v2653, 64
      %v2682 = vpop.permute.xlu0 %2681
      %2683 = vrot.lane.b32.xlu0 %v2654, 64
      %v2684 = vpop.permute.xlu0 %2683
      %2685 = vrot.lane.b32.xlu0 %v2655, 64
      %v2686 = vpop.permute.xlu0 %2685
      %2687 = vrot.lane.b32.xlu0 %v2656, 64
      %v2688 = vpop.permute.xlu0 %2687
      %2705 = vmatpush.bf16.msra.mxu0 %v2672
      %2706 = vmatpush.bf16.msra.mxu0 %v2670
      %2707 = vmatpush.bf16.msra.mxu0 %v2668
      %2708 = vmatpush.bf16.msra.mxu0 %v2666
      %2709 = vmatpush.bf16.msra.mxu0 %v2664
      %2710 = vmatpush.bf16.msra.mxu0 %v2662
      %2711 = vmatpush.bf16.msra.mxu0 %v2660
      %2712 = vmatpush.bf16.msra.mxu0 %v2658
      %2713 = vmatmul.bf16.gmra.mxu0 %v2513
      %v2714 = vpop.f32.mrf.mxu0
      %v2715 = vadd.f32 0.0, %v2714
      %v2716 = vpop.f32.mrf.mxu0
      %v2717 = vadd.f32 0.0, %v2716
      %2718 = vmatmul.bf16.gmra.mxu0 %v2515
      %v2719 = vpop.f32.mrf.mxu0
      %v2720 = vadd.f32 0.0, %v2719
      %v2721 = vpop.f32.mrf.mxu0
      %v2722 = vadd.f32 0.0, %v2721
      %2723 = vmatmul.bf16.gmra.mxu0 %v2517
      %v2724 = vpop.f32.mrf.mxu0
      %v2725 = vadd.f32 0.0, %v2724
      %v2726 = vpop.f32.mrf.mxu0
      %v2727 = vadd.f32 0.0, %v2726
      %2728 = vmatmul.bf16.gmra.mxu0 %v2519
      %v2729 = vpop.f32.mrf.mxu0
      %v2730 = vadd.f32 0.0, %v2729
      %v2731 = vpop.f32.mrf.mxu0
      %v2732 = vadd.f32 0.0, %v2731
      %2733 = vmatmul.bf16.gmra.mxu0 %v2521
      %v2734 = vpop.f32.mrf.mxu0
      %v2735 = vadd.f32 0.0, %v2734
      %v2736 = vpop.f32.mrf.mxu0
      %v2737 = vadd.f32 0.0, %v2736
      %2738 = vmatmul.bf16.gmra.mxu0 %v2523
      %v2739 = vpop.f32.mrf.mxu0
      %v2740 = vadd.f32 0.0, %v2739
      %v2741 = vpop.f32.mrf.mxu0
      %v2742 = vadd.f32 0.0, %v2741
      %2743 = vmatmul.bf16.gmra.mxu0 %v2525
      %v2744 = vpop.f32.mrf.mxu0
      %v2745 = vadd.f32 0.0, %v2744
      %v2746 = vpop.f32.mrf.mxu0
      %v2747 = vadd.f32 0.0, %v2746
      %2748 = vmatmul.bf16.gmra.mxu0 %v2527
      %v2749 = vpop.f32.mrf.mxu0
      %v2750 = vadd.f32 0.0, %v2749
      %v2751 = vpop.f32.mrf.mxu0
      %v2752 = vadd.f32 0.0, %v2751
      %2753 = vmatmul.bf16.gmra.mxu0 %v2529
      %v2754 = vpop.f32.mrf.mxu0
      %v2755 = vadd.f32 0.0, %v2754
      %v2756 = vpop.f32.mrf.mxu0
      %v2757 = vadd.f32 0.0, %v2756
      %2758 = vmatmul.bf16.gmra.mxu0 %v2531
      %v2759 = vpop.f32.mrf.mxu0
      %v2760 = vadd.f32 0.0, %v2759
      %v2761 = vpop.f32.mrf.mxu0
      %v2762 = vadd.f32 0.0, %v2761
      %2763 = vmatmul.bf16.gmra.mxu0 %v2533
      %v2764 = vpop.f32.mrf.mxu0
      %v2765 = vadd.f32 0.0, %v2764
      %v2766 = vpop.f32.mrf.mxu0
      %v2767 = vadd.f32 0.0, %v2766
      %2768 = vmatmul.bf16.gmra.mxu0 %v2535
      %v2769 = vpop.f32.mrf.mxu0
      %v2770 = vadd.f32 0.0, %v2769
      %v2771 = vpop.f32.mrf.mxu0
      %v2772 = vadd.f32 0.0, %v2771
      %2773 = vmatmul.bf16.gmra.mxu0 %v2537
      %v2774 = vpop.f32.mrf.mxu0
      %v2775 = vadd.f32 0.0, %v2774
      %v2776 = vpop.f32.mrf.mxu0
      %v2777 = vadd.f32 0.0, %v2776
      %2778 = vmatmul.bf16.gmra.mxu0 %v2539
      %v2779 = vpop.f32.mrf.mxu0
      %v2780 = vadd.f32 0.0, %v2779
      %v2781 = vpop.f32.mrf.mxu0
      %v2782 = vadd.f32 0.0, %v2781
      %2783 = vmatmul.bf16.gmra.mxu0 %v2541
      %v2784 = vpop.f32.mrf.mxu0
      %v2785 = vadd.f32 0.0, %v2784
      %v2786 = vpop.f32.mrf.mxu0
      %v2787 = vadd.f32 0.0, %v2786
      %2788 = vmatmul.bf16.gmra.mxu0 %v2543
      %v2789 = vpop.f32.mrf.mxu0
      %v2790 = vadd.f32 0.0, %v2789
      %v2791 = vpop.f32.mrf.mxu0
      %v2792 = vadd.f32 0.0, %v2791
      %2793 = vdwg.mxu0
      %2794 = vmatpush.bf16.msra.mxu0 %v2688
      %2795 = vmatpush.bf16.msra.mxu0 %v2686
      %2796 = vmatpush.bf16.msra.mxu0 %v2684
      %2797 = vmatpush.bf16.msra.mxu0 %v2682
      %2798 = vmatpush.bf16.msra.mxu0 %v2680
      %2799 = vmatpush.bf16.msra.mxu0 %v2678
      %2800 = vmatpush.bf16.msra.mxu0 %v2676
      %2801 = vmatpush.bf16.msra.mxu0 %v2674
      %2802 = vmatmul.bf16.gmra.mxu0 %v2514
      %v2803 = vpop.f32.mrf.mxu0
      %v2804 = vadd.f32 %v2715, %v2803
      %v2805 = vpop.f32.mrf.mxu0
      %v2806 = vadd.f32 %v2717, %v2805
      %2807 = vmatmul.bf16.gmra.mxu0 %v2516
      %v2808 = vpop.f32.mrf.mxu0
      %v2809 = vadd.f32 %v2720, %v2808
      %v2810 = vpop.f32.mrf.mxu0
      %v2811 = vadd.f32 %v2722, %v2810
      %2812 = vmatmul.bf16.gmra.mxu0 %v2518
      %v2813 = vpop.f32.mrf.mxu0
      %v2814 = vadd.f32 %v2725, %v2813
      %v2815 = vpop.f32.mrf.mxu0
      %v2816 = vadd.f32 %v2727, %v2815
      %2817 = vmatmul.bf16.gmra.mxu0 %v2520
      %v2818 = vpop.f32.mrf.mxu0
      %v2819 = vadd.f32 %v2730, %v2818
      %v2820 = vpop.f32.mrf.mxu0
      %v2821 = vadd.f32 %v2732, %v2820
      %2822 = vmatmul.bf16.gmra.mxu0 %v2522
      %v2823 = vpop.f32.mrf.mxu0
      %v2824 = vadd.f32 %v2735, %v2823
      %v2825 = vpop.f32.mrf.mxu0
      %v2826 = vadd.f32 %v2737, %v2825
      %2827 = vmatmul.bf16.gmra.mxu0 %v2524
      %v2828 = vpop.f32.mrf.mxu0
      %v2829 = vadd.f32 %v2740, %v2828
      %v2830 = vpop.f32.mrf.mxu0
      %v2831 = vadd.f32 %v2742, %v2830
      %2832 = vmatmul.bf16.gmra.mxu0 %v2526
      %v2833 = vpop.f32.mrf.mxu0
      %v2834 = vadd.f32 %v2745, %v2833
      %v2835 = vpop.f32.mrf.mxu0
      %v2836 = vadd.f32 %v2747, %v2835
      %2837 = vmatmul.bf16.gmra.mxu0 %v2528
      %v2838 = vpop.f32.mrf.mxu0
      %v2839 = vadd.f32 %v2750, %v2838
      %v2840 = vpop.f32.mrf.mxu0
      %v2841 = vadd.f32 %v2752, %v2840
      %2842 = vmatmul.bf16.gmra.mxu0 %v2530
      %v2843 = vpop.f32.mrf.mxu0
      %v2844 = vadd.f32 %v2755, %v2843
      %v2845 = vpop.f32.mrf.mxu0
      %v2846 = vadd.f32 %v2757, %v2845
      %2847 = vmatmul.bf16.gmra.mxu0 %v2532
      %v2848 = vpop.f32.mrf.mxu0
      %v2849 = vadd.f32 %v2760, %v2848
      %v2850 = vpop.f32.mrf.mxu0
      %v2851 = vadd.f32 %v2762, %v2850
      %2852 = vmatmul.bf16.gmra.mxu0 %v2534
      %v2853 = vpop.f32.mrf.mxu0
      %v2854 = vadd.f32 %v2765, %v2853
      %v2855 = vpop.f32.mrf.mxu0
      %v2856 = vadd.f32 %v2767, %v2855
      %2857 = vmatmul.bf16.gmra.mxu0 %v2536
      %v2858 = vpop.f32.mrf.mxu0
      %v2859 = vadd.f32 %v2770, %v2858
      %v2860 = vpop.f32.mrf.mxu0
      %v2861 = vadd.f32 %v2772, %v2860
      %2862 = vmatmul.bf16.gmra.mxu0 %v2538
      %v2863 = vpop.f32.mrf.mxu0
      %v2864 = vadd.f32 %v2775, %v2863
      %v2865 = vpop.f32.mrf.mxu0
      %v2866 = vadd.f32 %v2777, %v2865
      %2867 = vmatmul.bf16.gmra.mxu0 %v2540
      %v2868 = vpop.f32.mrf.mxu0
      %v2869 = vadd.f32 %v2780, %v2868
      %v2870 = vpop.f32.mrf.mxu0
      %v2871 = vadd.f32 %v2782, %v2870
      %2872 = vmatmul.bf16.gmra.mxu0 %v2542
      %v2873 = vpop.f32.mrf.mxu0
      %v2874 = vadd.f32 %v2785, %v2873
      %v2875 = vpop.f32.mrf.mxu0
      %v2876 = vadd.f32 %v2787, %v2875
      %2877 = vmatmul.bf16.gmra.mxu0 %v2544
      %v2878 = vpop.f32.mrf.mxu0
      %v2879 = vadd.f32 %v2790, %v2878
      %v2880 = vpop.f32.mrf.mxu0
      %v2881 = vadd.f32 %v2792, %v2880
      %2882 = vdwg.mxu0
      %v2883 = vpack.c.bf16 %v2806, %v2804
      %v2884 = vpack.c.bf16 %v2811, %v2809
      %v2885 = vpack.c.bf16 %v2816, %v2814
      %v2886 = vpack.c.bf16 %v2821, %v2819
      %v2887 = vpack.c.bf16 %v2826, %v2824
      %v2888 = vpack.c.bf16 %v2831, %v2829
      %v2889 = vpack.c.bf16 %v2836, %v2834
      %v2890 = vpack.c.bf16 %v2841, %v2839
      %v2891 = vpack.c.bf16 %v2846, %v2844
      %v2892 = vpack.c.bf16 %v2851, %v2849
      %v2893 = vpack.c.bf16 %v2856, %v2854
      %v2894 = vpack.c.bf16 %v2861, %v2859
      %v2895 = vpack.c.bf16 %v2866, %v2864
      %v2896 = vpack.c.bf16 %v2871, %v2869
      %v2897 = vpack.c.bf16 %v2876, %v2874
      %v2898 = vpack.c.bf16 %v2881, %v2879
      %v2899 = vld [vmem:[%s3] sm:$0xf]
      %v2900 = vld [vmem:[%s3 + $0x4] sm:$0xf]
      %v2901 = vld [vmem:[%s3 + $0x8] sm:$0xf]
      %v2902 = vld [vmem:[%s3 + $0xc] sm:$0xf]
      %v2903 = vperm.slane %v229, 4
      %v2908 = vunpack.c.l.b16 %v2899
      %v2909 = vunpack.c.l.b16 %v2900
      %v2910 = vunpack.c.l.b16 %v2901
      %v2911 = vunpack.c.l.b16 %v2902
      %v2912 = vpack.c.b16 %v2909, %v2908
      %v2913 = vpack.c.b16 %v2911, %v2910
      %v2917 = vsel %vm262, %v2883, 0
      %v2920 = vsel %vm262, %v2884, 0
      %v2923 = vsel %vm262, %v2885, 0
      %v2926 = vsel %vm262, %v2886, 0
      %v2929 = vsel %vm262, %v2887, 0
      %v2932 = vsel %vm262, %v2888, 0
      %v2935 = vsel %vm262, %v2889, 0
      %v2938 = vsel %vm262, %v2890, 0
      %v2941 = vsel %vm262, %v2891, 0
      %v2944 = vsel %vm262, %v2892, 0
      %v2947 = vsel %vm262, %v2893, 0
      %v2950 = vsel %vm262, %v2894, 0
      %v2953 = vsel %vm262, %v2895, 0
      %v2956 = vsel %vm262, %v2896, 0
      %v2959 = vsel %vm262, %v2897, 0
      %v2962 = vsel %vm262, %v2898, 0
      %2964 = vmatpush.bf16.msra.mxu0 0
      %2965 = vmatpush.bf16.msra.mxu0 0
      %2966 = vmatpush.bf16.msra.mxu0 0
      %2967 = vmatpush.bf16.msra.mxu0 0
      %2968 = vmatpush.bf16.msra.mxu0 0
      %2969 = vmatpush.bf16.msra.mxu0 0
      %2970 = vmatpush.bf16.msra.mxu0 %v2913
      %2971 = vmatpush.bf16.msra.mxu0 %v2912
      %2972 = vmatmul.bf16.gmra.mxu0 %v2917
      %v2973 = vpop.f32.mrf.mxu0
      %v2974 = vadd.f32 %v2903, %v2973
      %v2975 = vpop.f32.mrf.mxu0
      %v2976 = vadd.f32 %v2903, %v2975
      %2977 = vmatmul.bf16.gmra.mxu0 %v2920
      %v2978 = vpop.f32.mrf.mxu0
      %v2979 = vadd.f32 %v2903, %v2978
      %v2980 = vpop.f32.mrf.mxu0
      %v2981 = vadd.f32 %v2903, %v2980
      %2982 = vmatmul.bf16.gmra.mxu0 %v2923
      %v2983 = vpop.f32.mrf.mxu0
      %v2984 = vadd.f32 %v2903, %v2983
      %v2985 = vpop.f32.mrf.mxu0
      %v2986 = vadd.f32 %v2903, %v2985
      %2987 = vmatmul.bf16.gmra.mxu0 %v2926
      %v2988 = vpop.f32.mrf.mxu0
      %v2989 = vadd.f32 %v2903, %v2988
      %v2990 = vpop.f32.mrf.mxu0
      %v2991 = vadd.f32 %v2903, %v2990
      %2992 = vmatmul.bf16.gmra.mxu0 %v2929
      %v2993 = vpop.f32.mrf.mxu0
      %v2994 = vadd.f32 %v2903, %v2993
      %v2995 = vpop.f32.mrf.mxu0
      %v2996 = vadd.f32 %v2903, %v2995
      %2997 = vmatmul.bf16.gmra.mxu0 %v2932
      %v2998 = vpop.f32.mrf.mxu0
      %v2999 = vadd.f32 %v2903, %v2998
      %v3000 = vpop.f32.mrf.mxu0
      %v3001 = vadd.f32 %v2903, %v3000
      %3002 = vmatmul.bf16.gmra.mxu0 %v2935
      %v3003 = vpop.f32.mrf.mxu0
      %v3004 = vadd.f32 %v2903, %v3003
      %v3005 = vpop.f32.mrf.mxu0
      %v3006 = vadd.f32 %v2903, %v3005
      %3007 = vmatmul.bf16.gmra.mxu0 %v2938
      %v3008 = vpop.f32.mrf.mxu0
      %v3009 = vadd.f32 %v2903, %v3008
      %v3010 = vpop.f32.mrf.mxu0
      %v3011 = vadd.f32 %v2903, %v3010
      %3012 = vmatmul.bf16.gmra.mxu0 %v2941
      %v3013 = vpop.f32.mrf.mxu0
      %v3014 = vadd.f32 %v2903, %v3013
      %v3015 = vpop.f32.mrf.mxu0
      %v3016 = vadd.f32 %v2903, %v3015
      %3017 = vmatmul.bf16.gmra.mxu0 %v2944
      %v3018 = vpop.f32.mrf.mxu0
      %v3019 = vadd.f32 %v2903, %v3018
      %v3020 = vpop.f32.mrf.mxu0
      %v3021 = vadd.f32 %v2903, %v3020
      %3022 = vmatmul.bf16.gmra.mxu0 %v2947
      %v3023 = vpop.f32.mrf.mxu0
      %v3024 = vadd.f32 %v2903, %v3023
      %v3025 = vpop.f32.mrf.mxu0
      %v3026 = vadd.f32 %v2903, %v3025
      %3027 = vmatmul.bf16.gmra.mxu0 %v2950
      %v3028 = vpop.f32.mrf.mxu0
      %v3029 = vadd.f32 %v2903, %v3028
      %v3030 = vpop.f32.mrf.mxu0
      %v3031 = vadd.f32 %v2903, %v3030
      %3032 = vmatmul.bf16.gmra.mxu0 %v2953
      %v3033 = vpop.f32.mrf.mxu0
      %v3034 = vadd.f32 %v2903, %v3033
      %v3035 = vpop.f32.mrf.mxu0
      %v3036 = vadd.f32 %v2903, %v3035
      %3037 = vmatmul.bf16.gmra.mxu0 %v2956
      %v3038 = vpop.f32.mrf.mxu0
      %v3039 = vadd.f32 %v2903, %v3038
      %v3040 = vpop.f32.mrf.mxu0
      %v3041 = vadd.f32 %v2903, %v3040
      %3042 = vmatmul.bf16.gmra.mxu0 %v2959
      %v3043 = vpop.f32.mrf.mxu0
      %v3044 = vadd.f32 %v2903, %v3043
      %v3045 = vpop.f32.mrf.mxu0
      %v3046 = vadd.f32 %v2903, %v3045
      %3047 = vmatmul.bf16.gmra.mxu0 %v2962
      %v3048 = vpop.f32.mrf.mxu0
      %v3049 = vadd.f32 %v2903, %v3048
      %v3050 = vpop.f32.mrf.mxu0
      %v3051 = vadd.f32 %v2903, %v3050
      %3052 = vdwg.mxu0
      %3053 = vst.msk [vmem:[%s226] sm:$0xff] %vm262, %v2974
      %3054 = vst.msk [vmem:[%s226 + $0x8] sm:$0xff] %vm262, %v2976
      %3055 = vst.msk [vmem:[%s226 + $0x10] sm:$0xff] %vm262, %v2979
      %3056 = vst.msk [vmem:[%s226 + $0x18] sm:$0xff] %vm262, %v2981
      %3057 = vst.msk [vmem:[%s226 + $0x20] sm:$0xff] %vm262, %v2984
      %3058 = vst.msk [vmem:[%s226 + $0x28] sm:$0xff] %vm262, %v2986
      %3059 = vst.msk [vmem:[%s226 + $0x30] sm:$0xff] %vm262, %v2989
      %3060 = vst.msk [vmem:[%s226 + $0x38] sm:$0xff] %vm262, %v2991
      %3061 = vst.msk [vmem:[%s226 + $0x40] sm:$0xff] %vm262, %v2994
      %3062 = vst.msk [vmem:[%s226 + $0x48] sm:$0xff] %vm262, %v2996
      %3063 = vst.msk [vmem:[%s226 + $0x50] sm:$0xff] %vm262, %v2999
      %3064 = vst.msk [vmem:[%s226 + $0x58] sm:$0xff] %vm262, %v3001
      %3065 = vst.msk [vmem:[%s226 + $0x60] sm:$0xff] %vm262, %v3004
      %3066 = vst.msk [vmem:[%s226 + $0x68] sm:$0xff] %vm262, %v3006
      %3067 = vst.msk [vmem:[%s226 + $0x70] sm:$0xff] %vm262, %v3009
      %3068 = vst.msk [vmem:[%s226 + $0x78] sm:$0xff] %vm262, %v3011
      %3069 = vst.msk [vmem:[%s226 + $0x80] sm:$0xff] %vm262, %v3014
      %3070 = vst.msk [vmem:[%s226 + $0x88] sm:$0xff] %vm262, %v3016
      %3071 = vst.msk [vmem:[%s226 + $0x90] sm:$0xff] %vm262, %v3019
      %3072 = vst.msk [vmem:[%s226 + $0x98] sm:$0xff] %vm262, %v3021
      %3073 = vst.msk [vmem:[%s226 + $0xa0] sm:$0xff] %vm262, %v3024
      %3074 = vst.msk [vmem:[%s226 + $0xa8] sm:$0xff] %vm262, %v3026
      %3075 = vst.msk [vmem:[%s226 + $0xb0] sm:$0xff] %vm262, %v3029
      %3076 = vst.msk [vmem:[%s226 + $0xb8] sm:$0xff] %vm262, %v3031
      %3077 = vst.msk [vmem:[%s226 + $0xc0] sm:$0xff] %vm262, %v3034
      %3078 = vst.msk [vmem:[%s226 + $0xc8] sm:$0xff] %vm262, %v3036
      %3079 = vst.msk [vmem:[%s226 + $0xd0] sm:$0xff] %vm262, %v3039
      %3080 = vst.msk [vmem:[%s226 + $0xd8] sm:$0xff] %vm262, %v3041
      %3081 = vst.msk [vmem:[%s226 + $0xe0] sm:$0xff] %vm262, %v3044
      %3082 = vst.msk [vmem:[%s226 + $0xe8] sm:$0xff] %vm262, %v3046
      %3083 = vst.msk [vmem:[%s226 + $0xf0] sm:$0xff] %vm262, %v3049
      %3084 = vst.msk [vmem:[%s226 + $0xf8] sm:$0xff] %vm262, %v3051
      %s3085 = smul.u32 32, %s16
      %p3086 = scmp.lt.s32.totalorder %s3085, 63
      %s3087 = scalar_select %p3086, %s3085, 63
      %s3088 = smul.addr %s3087, 8
      %s3089 = scalar_lea.vmem %s5, %s3088
      // Predicated region
      $region41: #{tpu_custom_call.1} parent=39 // pred_check
        %p3090 = pneg %p144
      $region42: #{tpu_custom_call.1} parent=39 // pred_check_branch
        %3092 = sbr.rel (%p3090) target = $region44
      $region43: #{tpu_custom_call.1} parent=39 // pred_region
        %s3093 = smul.u32 32, %s16
      $region44: #{tpu_custom_call.1} parent=39 // pred_fallthru
        _
    $region40: #{tpu_custom_call.1} parent=5 // pred_fallthru
      _
    %p3094 = scmp.le.s32.totalorder 2, %s11
    // Predicated region
    $region45: #{tpu_custom_call.1} parent=5 // pred_check
      %p3095 = pneg %p3094
    $region46: #{tpu_custom_call.1} parent=5 // pred_check_branch
      %3097 = sbr.rel (%p3095) target = $region48
    $region47: #{tpu_custom_call.1} parent=5 // pred_region
      %s3098 = ssub.s32 %s11, 2
      // Predicated region
      $region49: #{tpu_custom_call.1} parent=47 // pred_check
        %p3099 = pneg %p150
      $region50: #{tpu_custom_call.1} parent=47 // pred_check_branch
        %3101 = sbr.rel (%p3099) target = $region52
      $region51: #{tpu_custom_call.1} parent=47 // pred_region
        %s3102 = smul.u32 32, %s17
        %p3103 = scmp.lt.s32.totalorder %s3102, 63
        %s3104 = scalar_select %p3103, %s3102, 63
        %s3105 = smul.addr %s3104, 8
        %s3106 = scalar_lea.vmem %s5, %s3105
      $region52: #{tpu_custom_call.1} parent=47 // pred_fallthru
        _
    $region48: #{tpu_custom_call.1} parent=5 // pred_fallthru
      _
  $region6: #{tpu_custom_call.1} parent=0 // loop_footer
    %s15 = sadd.s32 1, %s11
  $region7: #{tpu_custom_call.1} parent=0 // loop_footer_branch
    %10 = sbr.rel target = $region3
  $region8: #{tpu_custom_call.1} parent=0 // loop_exit
    _

</llo_original>
